<compile_context>
chip_gen: v7x
topology: tpu7x:2x2x1
jax: 0.10.0
libtpu: 0.0.40
codegen_flags: <defaults>
</compile_context>

<pallas_src>
import functools

import jax
import jax.numpy as jnp
from jax import lax
from jax.experimental import pallas as pl
from jax.experimental.pallas import tpu as pltpu


def _kth_largest_rowwise(s, k_top, num_iters=32):
    """Per-row k-th largest value of s ([R, C] f32) via fixed-step value bisection.

    Each iteration is one broadcast compare (VPU) + one row-sum (XLU); cost is
    independent of k_top.  At convergence `lo` equals the exact k-th largest
    value of the row (up to (max-min)/2^32, far below f32 score gaps).
    """
    lo = jnp.min(s, axis=-1, keepdims=True)
    hi = jnp.max(s, axis=-1, keepdims=True)
    kf = jnp.float32(k_top)

    def body(_, carry):
        lo, hi = carry
        mid = 0.5 * (lo + hi)
        cnt = jnp.sum(jnp.where(s >= mid, jnp.float32(1.0), jnp.float32(0.0)),
                      axis=-1, keepdims=True)
        ge = cnt >= kf                       # mid is still <= k-th largest
        return jnp.where(ge, mid, lo), jnp.where(ge, hi, mid)

    lo, _ = lax.fori_loop(0, num_iters, body, (lo, hi))
    return lo


def _psa_kernel(q_ref, k_ref, v_ref,
                wq_ref, bq_ref, wk_ref, bk_ref, wv_ref, bv_ref,
                wo_ref, bo_ref,
                out_ref, attnw_ref,
                k_cache, v_cache,
                *, d_k, k_top, bisect_iters):
    qi = pl.program_id(1)
    h = pl.program_id(2)

    # K / V per-head projections are query-tile invariant: compute them only on
    # the first query tile of each batch element and cache in VMEM scratch.
    @pl.when(qi == 0)
    def _():
        x_k = k_ref[0]          # [Lk, D]
        x_v = v_ref[0]          # [Lk, D]
        k_cache[h] = (jnp.dot(x_k, wk_ref[0], preferred_element_type=jnp.float32)
                      + bk_ref[0])
        v_cache[h] = (jnp.dot(x_v, wv_ref[0], preferred_element_type=jnp.float32)
                      + bv_ref[0])

    Kh = k_cache[h]             # [Lk, d_k]
    Vh = v_cache[h]             # [Lk, d_k]

    x_q = q_ref[0]              # [tq, D]
    Qh = jnp.dot(x_q, wq_ref[0], preferred_element_type=jnp.float32) + bq_ref[0]

    # Scores: contract the last dims (MXU consumes RHS transposed for free).
    s = lax.dot_general(Qh, Kh, (((1,), (1,)), ((), ())),
                        preferred_element_type=jnp.float32)
    s = s * jnp.float32(1.0 / (d_k ** 0.5))          # [tq, Lk]

    lk = s.shape[-1]
    if k_top <= 0:
        # torch.topk(k=0) + scatter leaves -1e20 everywhere -> uniform softmax.
        w = jnp.full_like(s, jnp.float32(1.0 / lk))
    else:
        # Row max of the raw scores equals the row max of the masked scores
        # (the top-1 entry is always kept), so no masked tensor is needed.
        m = jnp.max(s, axis=-1, keepdims=True)
        e = jnp.exp(s - m)
        if k_top < lk:
            thresh = _kth_largest_rowwise(s, k_top, bisect_iters)
            e = jnp.where(s >= thresh, e, jnp.float32(0.0))
        denom = jnp.sum(e, axis=-1, keepdims=True)
        # Reciprocal-multiply (EUP slot) instead of a VPU divide.
        w = e * pl.reciprocal(denom, approx=False)

    attnw_ref[0, 0, :, :] = w

    head_out = jnp.dot(w, Vh, preferred_element_type=jnp.float32)               # [tq, d_k]
    contrib = jnp.dot(head_out, wo_ref[0], preferred_element_type=jnp.float32)  # [tq, D]

    # Output projection accumulated over the (innermost) head axis.
    @pl.when(h == 0)
    def _():
        out_ref[0] = contrib + bo_ref[...]

    @pl.when(h > 0)
    def _():
        out_ref[0] = out_ref[0] + contrib


def _pick_q_tile(L):
    for t in (512, 256, 128):
        if L >= t and L % t == 0:
            return t
    return L


def prob_sparse_mha(query, key, value, params, *, n_heads, topk_ratio=0.25,
                    q_tile=None):
    """Pallas implementation of ProbSparseMultiheadAttention.forward (mask=None).

    query/key/value: [N, L, d_model] float32.
    params: dict with Wq, bq, Wk, bk, Wv, bv, Wo, bo in PyTorch nn.Linear layout
            (W is (out, in), b is (out,)).
    Returns (output [N, Lq, d_model], weights [N, H, Lq, Lk]).
    """
    N, Lq, D = query.shape
    Lk = key.shape[1]
    assert D % n_heads == 0, "d_model must be divisible by n_heads"
    d_k = D // n_heads
    k_top = min(int(topk_ratio * Lk), Lk)
    tq = q_tile if q_tile is not None else _pick_q_tile(Lq)
    assert Lq % tq == 0

    # Head-major weight layout so per-head slices are full (last-two-dims)
    # blocks, never sub-128 lane slices:
    #   Wx.T (in, out) -> (H, D, d_k);  Wo.T (in, out) -> (H, d_k, D).
    def per_head_in(w):                       # w: (out, in) torch layout
        return w.T.reshape(D, n_heads, d_k).transpose(1, 0, 2)

    wq_h = per_head_in(params["Wq"])
    wk_h = per_head_in(params["Wk"])
    wv_h = per_head_in(params["Wv"])
    wo_h = params["Wo"].T.reshape(n_heads, d_k, D)
    bq_h = params["bq"].reshape(n_heads, 1, d_k)
    bk_h = params["bk"].reshape(n_heads, 1, d_k)
    bv_h = params["bv"].reshape(n_heads, 1, d_k)
    bo = params["bo"].reshape(1, D)

    kernel = functools.partial(_psa_kernel, d_k=d_k, k_top=k_top, bisect_iters=32)

    w_in_spec = pl.BlockSpec((1, D, d_k), lambda n, q, h: (h, 0, 0))
    b_in_spec = pl.BlockSpec((1, 1, d_k), lambda n, q, h: (h, 0, 0))

    out, weights = pl.pallas_call(
        kernel,
        out_shape=(
            jax.ShapeDtypeStruct((N, Lq, D), jnp.float32),
            jax.ShapeDtypeStruct((N, n_heads, Lq, Lk), jnp.float32),
        ),
        grid_spec=pltpu.PrefetchScalarGridSpec(
            num_scalar_prefetch=0,
            grid=(N, Lq // tq, n_heads),
            in_specs=[
                pl.BlockSpec((1, tq, D), lambda n, q, h: (n, q, 0)),   # query tile
                pl.BlockSpec((1, Lk, D), lambda n, q, h: (n, 0, 0)),   # key
                pl.BlockSpec((1, Lk, D), lambda n, q, h: (n, 0, 0)),   # value
                w_in_spec, b_in_spec,                                  # Wq, bq (per head)
                w_in_spec, b_in_spec,                                  # Wk, bk (per head)
                w_in_spec, b_in_spec,                                  # Wv, bv (per head)
                pl.BlockSpec((1, d_k, D), lambda n, q, h: (h, 0, 0)),  # Wo (per head)
                pl.BlockSpec((1, D), lambda n, q, h: (0, 0)),          # bo
            ],
            out_specs=[
                pl.BlockSpec((1, tq, D), lambda n, q, h: (n, q, 0)),
                pl.BlockSpec((1, 1, tq, Lk), lambda n, q, h: (n, h, q, 0)),
            ],
            scratch_shapes=[
                pltpu.VMEM((n_heads, Lk, d_k), jnp.float32),   # cached K per head
                pltpu.VMEM((n_heads, Lk, d_k), jnp.float32),   # cached V per head
            ],
        ),
        # q-tile axis carries the K/V cache dependence -> "arbitrary";
        # batch stays "parallel" for megacore sharding.
        compiler_params=pltpu.CompilerParams(
            dimension_semantics=("parallel", "arbitrary", "arbitrary")),
    )(query, key, value, wq_h, bq_h, wk_h, bk_h, wv_h, bv_h, wo_h, bo)
    return out, weights


def _reference_jax(query, key, value, params, *, n_heads, topk_ratio=0.25):
    """Pure-JAX reference mirroring the PyTorch forward (mask=None)."""
    N, Lq, D = query.shape
    Lk = key.shape[1]
    d_k = D // n_heads
    k_top = int(topk_ratio * Lk)

    def lin(x, W, b):
        return x @ W.T + b

    Q = lin(query, params["Wq"], params["bq"]).reshape(N, Lq, n_heads, d_k)
    K = lin(key, params["Wk"], params["bk"]).reshape(N, Lk, n_heads, d_k)
    V = lin(value, params["Wv"], params["bv"]).reshape(N, Lk, n_heads, d_k)

    scores = jnp.einsum("nqhd,nkhd->nhqk", Q, K) / (d_k ** 0.5)
    top_vals, _ = jax.lax.top_k(scores, k_top)
    thresh = top_vals[..., -1:]
    masked = jnp.where(scores >= thresh, scores, jnp.float32(-1e20))
    m = jnp.max(masked, axis=-1, keepdims=True)
    e = jnp.exp(masked - m)
    w = e / jnp.sum(e, axis=-1, keepdims=True)
    attn = jnp.einsum("nhql,nlhd->nqhd", w, V).reshape(N, Lq, D)
    out = lin(attn, params["Wo"], params["bo"])
    return out, w


if __name__ == "__main__":
    # Small shapes consistent with the module.
    N, L, d_model, n_heads = 2, 16, 32, 4
    topk_ratio = 0.25

    root = jax.random.PRNGKey(0)
    keys = jax.random.split(root, 12)

    # Deterministic synthetic parameters (PyTorch nn.Linear layout: W=(out,in)).
    scale = 0.1
    params = {
        "Wq": scale * jax.random.normal(keys[0], (d_model, d_model), jnp.float32),
        "bq": scale * jax.random.normal(keys[1], (d_model,), jnp.float32),
        "Wk": scale * jax.random.normal(keys[2], (d_model, d_model), jnp.float32),
        "bk": scale * jax.random.normal(keys[3], (d_model,), jnp.float32),
        "Wv": scale * jax.random.normal(keys[4], (d_model, d_model), jnp.float32),
        "bv": scale * jax.random.normal(keys[5], (d_model,), jnp.float32),
        "Wo": scale * jax.random.normal(keys[6], (d_model, d_model), jnp.float32),
        "bo": scale * jax.random.normal(keys[7], (d_model,), jnp.float32),
    }

    query = jax.random.normal(keys[8], (N, L, d_model), jnp.float32)
    key = jax.random.normal(keys[9], (N, L, d_model), jnp.float32)
    value = jax.random.normal(keys[10], (N, L, d_model), jnp.float32)

    ref_out, ref_w = _reference_jax(
        query, key, value, params, n_heads=n_heads, topk_ratio=topk_ratio
    )

    # 1) Default tiling (single query tile at this sequence length).
    out, weights = prob_sparse_mha(
        query, key, value, params, n_heads=n_heads, topk_ratio=topk_ratio
    )
    out = jax.block_until_ready(out)
    weights = jax.block_until_ready(weights)
    assert out.shape == (N, L, d_model)
    assert weights.shape == (N, n_heads, L, L)
    assert jnp.allclose(out, ref_out, atol=1e-5, rtol=1e-5)
    assert jnp.allclose(weights, ref_w, atol=1e-5, rtol=1e-5)

    # 2) Forced multi-tile run: exercises the q>0 path that reuses the cached
    #    per-head K/V projections from VMEM scratch.
    out2, weights2 = prob_sparse_mha(
        query, key, value, params, n_heads=n_heads, topk_ratio=topk_ratio,
        q_tile=8,
    )
    out2 = jax.block_until_ready(out2)
    weights2 = jax.block_until_ready(weights2)
    assert jnp.allclose(out2, ref_out, atol=1e-5, rtol=1e-5)
    assert jnp.allclose(weights2, ref_w, atol=1e-5, rtol=1e-5)

    print("KERNEL_OK")
</pallas_src>

<mosaic_0001>
module attributes {stable_mosaic.version = 11 : i64} {
  func.func @_psa_kernel(%arg0: i32, %arg1: i32, %arg2: i32, %arg3: memref<1x16x32xf32, #tpu.memory_space<vmem>>, %arg4: memref<1x16x32xf32, #tpu.memory_space<vmem>>, %arg5: memref<1x16x32xf32, #tpu.memory_space<vmem>>, %arg6: memref<1x32x8xf32, #tpu.memory_space<vmem>>, %arg7: memref<1x1x8xf32, #tpu.memory_space<vmem>>, %arg8: memref<1x32x8xf32, #tpu.memory_space<vmem>>, %arg9: memref<1x1x8xf32, #tpu.memory_space<vmem>>, %arg10: memref<1x32x8xf32, #tpu.memory_space<vmem>>, %arg11: memref<1x1x8xf32, #tpu.memory_space<vmem>>, %arg12: memref<1x8x32xf32, #tpu.memory_space<vmem>>, %arg13: memref<1x32xf32, #tpu.memory_space<vmem>>, %arg14: memref<1x16x32xf32, #tpu.memory_space<vmem>>, %arg15: memref<1x1x16x16xf32, #tpu.memory_space<vmem>>, %arg16: memref<4x16x8xf32, #tpu.memory_space<vmem>>, %arg17: memref<4x16x8xf32, #tpu.memory_space<vmem>>) attributes {dimension_semantics = [#tpu.dimension_semantics<parallel>, #tpu.dimension_semantics<arbitrary>, #tpu.dimension_semantics<arbitrary>], iteration_bounds = array<i64: 2, 1, 4>, scalar_prefetch = 0 : i64, scratch_operands = 2 : i64, tpu.core_type = #tpu.core_type<tc>, window_params = [{transform_indices = @transform_0, window_bounds = array<i64: 1, 16, 32>}, {transform_indices = @transform_1, window_bounds = array<i64: 1, 16, 32>}, {transform_indices = @transform_2, window_bounds = array<i64: 1, 16, 32>}, {transform_indices = @transform_3, window_bounds = array<i64: 1, 32, 8>}, {transform_indices = @transform_4, window_bounds = array<i64: 1, 1, 8>}, {transform_indices = @transform_5, window_bounds = array<i64: 1, 32, 8>}, {transform_indices = @transform_6, window_bounds = array<i64: 1, 1, 8>}, {transform_indices = @transform_7, window_bounds = array<i64: 1, 32, 8>}, {transform_indices = @transform_8, window_bounds = array<i64: 1, 1, 8>}, {transform_indices = @transform_9, window_bounds = array<i64: 1, 8, 32>}, {pipeline_mode = #tpu.pipeline_mode<synchronous>, transform_indices = @transform_10, window_bounds = array<i64: 1, 32>}, {transform_indices = @transform_11, window_bounds = array<i64: 1, 16, 32>}, {transform_indices = @transform_12, window_bounds = array<i64: 1, 1, 16, 16>}]} {
    %c0_i32 = arith.constant 0 : i32
    %0 = arith.cmpi eq, %arg1, %c0_i32 : i32
    %1 = arith.extui %0 : i1 to i32
    %c0_i32_0 = arith.constant 0 : i32
    %2 = arith.cmpi ne, %1, %c0_i32_0 : i32
    scf.if %2 {
      %c0_35 = arith.constant 0 : index
      %c0_36 = arith.constant 0 : index
      %c0_37 = arith.constant 0 : index
      %54 = vector.load %arg4[%c0_35, %c0_36, %c0_37] : memref<1x16x32xf32, #tpu.memory_space<vmem>>, vector<1x16x32xf32>
      %55 = vector.shape_cast %54 : vector<1x16x32xf32> to vector<16x32xf32>
      %c0_38 = arith.constant 0 : index
      %c0_39 = arith.constant 0 : index
      %c0_40 = arith.constant 0 : index
      %56 = vector.load %arg5[%c0_38, %c0_39, %c0_40] : memref<1x16x32xf32, #tpu.memory_space<vmem>>, vector<1x16x32xf32>
      %57 = vector.shape_cast %56 : vector<1x16x32xf32> to vector<16x32xf32>
      %c0_41 = arith.constant 0 : index
      %c0_42 = arith.constant 0 : index
      %c0_43 = arith.constant 0 : index
      %58 = vector.load %arg8[%c0_41, %c0_42, %c0_43] : memref<1x32x8xf32, #tpu.memory_space<vmem>>, vector<1x32x8xf32>
      %59 = vector.shape_cast %58 : vector<1x32x8xf32> to vector<32x8xf32>
      %cst_44 = arith.constant dense<0.000000e+00> : vector<16x8xf32>
      %60 = tpu.matmul %55, %59, %cst_44 {dimension_numbers = #tpu.dot_dimension_numbers<[1], [0], [0], [1], [0, 0, 1, 1], [], []>} : vector<16x32xf32>, vector<32x8xf32>, vector<16x8xf32> -> vector<16x8xf32>
      %c0_45 = arith.constant 0 : index
      %c0_46 = arith.constant 0 : index
      %c0_47 = arith.constant 0 : index
      %61 = vector.load %arg9[%c0_45, %c0_46, %c0_47] : memref<1x1x8xf32, #tpu.memory_space<vmem>>, vector<1x1x8xf32>
      %62 = vector.shape_cast %61 : vector<1x1x8xf32> to vector<1x8xf32>
      %63 = vector.broadcast %62 : vector<1x8xf32> to vector<16x8xf32>
      %64 = arith.addf %60, %63 : vector<16x8xf32>
      %65 = arith.index_cast %arg2 : i32 to index
      %c0_48 = arith.constant 0 : index
      %c0_49 = arith.constant 0 : index
      %66 = vector.load %arg16[%65, %c0_48, %c0_49] : memref<4x16x8xf32, #tpu.memory_space<vmem>>, vector<1x16x8xf32>
      %67 = vector.shape_cast %66 : vector<1x16x8xf32> to vector<16x8xf32>
      %68 = vector.shape_cast %64 : vector<16x8xf32> to vector<1x16x8xf32>
      tpu.vector_store %arg16[%65, %c0_48, %c0_49], %68 {strides = array<i32>} : memref<4x16x8xf32, #tpu.memory_space<vmem>>, vector<1x16x8xf32>,
      %c0_50 = arith.constant 0 : index
      %c0_51 = arith.constant 0 : index
      %c0_52 = arith.constant 0 : index
      %69 = vector.load %arg10[%c0_50, %c0_51, %c0_52] : memref<1x32x8xf32, #tpu.memory_space<vmem>>, vector<1x32x8xf32>
      %70 = vector.shape_cast %69 : vector<1x32x8xf32> to vector<32x8xf32>
      %cst_53 = arith.constant dense<0.000000e+00> : vector<16x8xf32>
      %71 = tpu.matmul %57, %70, %cst_53 {dimension_numbers = #tpu.dot_dimension_numbers<[1], [0], [0], [1], [0, 0, 1, 1], [], []>} : vector<16x32xf32>, vector<32x8xf32>, vector<16x8xf32> -> vector<16x8xf32>
      %c0_54 = arith.constant 0 : index
      %c0_55 = arith.constant 0 : index
      %c0_56 = arith.constant 0 : index
      %72 = vector.load %arg11[%c0_54, %c0_55, %c0_56] : memref<1x1x8xf32, #tpu.memory_space<vmem>>, vector<1x1x8xf32>
      %73 = vector.shape_cast %72 : vector<1x1x8xf32> to vector<1x8xf32>
      %74 = vector.broadcast %73 : vector<1x8xf32> to vector<16x8xf32>
      %75 = arith.addf %71, %74 : vector<16x8xf32>
      %76 = arith.index_cast %arg2 : i32 to index
      %c0_57 = arith.constant 0 : index
      %c0_58 = arith.constant 0 : index
      %77 = vector.load %arg17[%76, %c0_57, %c0_58] : memref<4x16x8xf32, #tpu.memory_space<vmem>>, vector<1x16x8xf32>
      %78 = vector.shape_cast %77 : vector<1x16x8xf32> to vector<16x8xf32>
      %79 = vector.shape_cast %75 : vector<16x8xf32> to vector<1x16x8xf32>
      tpu.vector_store %arg17[%76, %c0_57, %c0_58], %79 {strides = array<i32>} : memref<4x16x8xf32, #tpu.memory_space<vmem>>, vector<1x16x8xf32>,
    } else {
    }
    %3 = arith.index_cast %arg2 : i32 to index
    %c0 = arith.constant 0 : index
    %c0_1 = arith.constant 0 : index
    %4 = vector.load %arg16[%3, %c0, %c0_1] : memref<4x16x8xf32, #tpu.memory_space<vmem>>, vector<1x16x8xf32>
    %5 = vector.shape_cast %4 : vector<1x16x8xf32> to vector<16x8xf32>
    %6 = arith.index_cast %arg2 : i32 to index
    %c0_2 = arith.constant 0 : index
    %c0_3 = arith.constant 0 : index
    %7 = vector.load %arg17[%6, %c0_2, %c0_3] : memref<4x16x8xf32, #tpu.memory_space<vmem>>, vector<1x16x8xf32>
    %8 = vector.shape_cast %7 : vector<1x16x8xf32> to vector<16x8xf32>
    %c0_4 = arith.constant 0 : index
    %c0_5 = arith.constant 0 : index
    %c0_6 = arith.constant 0 : index
    %9 = vector.load %arg3[%c0_4, %c0_5, %c0_6] : memref<1x16x32xf32, #tpu.memory_space<vmem>>, vector<1x16x32xf32>
    %10 = vector.shape_cast %9 : vector<1x16x32xf32> to vector<16x32xf32>
    %c0_7 = arith.constant 0 : index
    %c0_8 = arith.constant 0 : index
    %c0_9 = arith.constant 0 : index
    %11 = vector.load %arg6[%c0_7, %c0_8, %c0_9] : memref<1x32x8xf32, #tpu.memory_space<vmem>>, vector<1x32x8xf32>
    %12 = vector.shape_cast %11 : vector<1x32x8xf32> to vector<32x8xf32>
    %cst = arith.constant dense<0.000000e+00> : vector<16x8xf32>
    %13 = tpu.matmul %10, %12, %cst {dimension_numbers = #tpu.dot_dimension_numbers<[1], [0], [0], [1], [0, 0, 1, 1], [], []>} : vector<16x32xf32>, vector<32x8xf32>, vector<16x8xf32> -> vector<16x8xf32>
    %c0_10 = arith.constant 0 : index
    %c0_11 = arith.constant 0 : index
    %c0_12 = arith.constant 0 : index
    %14 = vector.load %arg7[%c0_10, %c0_11, %c0_12] : memref<1x1x8xf32, #tpu.memory_space<vmem>>, vector<1x1x8xf32>
    %15 = vector.shape_cast %14 : vector<1x1x8xf32> to vector<1x8xf32>
    %16 = vector.broadcast %15 : vector<1x8xf32> to vector<16x8xf32>
    %17 = arith.addf %13, %16 : vector<16x8xf32>
    %cst_13 = arith.constant dense<0.000000e+00> : vector<16x16xf32>
    %18 = tpu.matmul %17, %5, %cst_13 {dimension_numbers = #tpu.dot_dimension_numbers<[1], [1], [0], [0], [0, 0, 1, 0], [], []>} : vector<16x8xf32>, vector<16x8xf32>, vector<16x16xf32> -> vector<16x16xf32>
    %cst_14 = arith.constant 0.353553385 : f32
    %19 = vector.broadcast %cst_14 : f32 to vector<16x16xf32>
    %20 = arith.mulf %18, %19 : vector<16x16xf32>
    %cst_15 = arith.constant dense<0xFF800000> : vector<16xf32>
    %21 = vector.multi_reduction <maximumf>, %20, %cst_15 [1] : vector<16x16xf32> to vector<16xf32>
    %22 = vector.shape_cast %21 : vector<16xf32> to vector<16x1xf32>
    %23 = vector.broadcast %22 : vector<16x1xf32> to vector<16x16xf32>
    %24 = arith.subf %20, %23 : vector<16x16xf32>
    %25 = math.exp %24 : vector<16x16xf32>
    %cst_16 = arith.constant dense<0x7F800000> : vector<16xf32>
    %26 = vector.multi_reduction <minimumf>, %20, %cst_16 [1] : vector<16x16xf32> to vector<16xf32>
    %27 = vector.shape_cast %26 : vector<16xf32> to vector<16x1xf32>
    %cst_17 = arith.constant dense<0xFF800000> : vector<16xf32>
    %28 = vector.multi_reduction <maximumf>, %20, %cst_17 [1] : vector<16x16xf32> to vector<16xf32>
    %29 = vector.shape_cast %28 : vector<16xf32> to vector<16x1xf32>
    %cst_18 = arith.constant 4.000000e+00 : f32
    %c0_i32_19 = arith.constant 0 : i32
    %c32_i32 = arith.constant 32 : i32
    %30 = arith.addi %c0_i32_19, %c32_i32 : i32
    %c1_i32 = arith.constant 1 : i32
    %31:2 = scf.for %arg18 = %c0_i32_19 to %30 step %c1_i32 iter_args(%arg19 = %27, %arg20 = %29) -> (vector<16x1xf32>, vector<16x1xf32>)  : i32 {
      %54 = arith.addf %arg19, %arg20 : vector<16x1xf32>
      %cst_35 = arith.constant 5.000000e-01 : f32
      %55 = vector.broadcast %cst_35 : f32 to vector<16x1xf32>
      %56 = arith.mulf %55, %54 : vector<16x1xf32>
      %57 = vector.broadcast %56 : vector<16x1xf32> to vector<16x16xf32>
      %58 = arith.cmpf oge, %20, %57 : vector<16x16xf32>
      %cst_36 = arith.constant 1.000000e+00 : f32
      %cst_37 = arith.constant 0.000000e+00 : f32
      %59 = vector.broadcast %cst_36 : f32 to vector<16x16xf32>
      %60 = vector.broadcast %cst_37 : f32 to vector<16x16xf32>
      %61 = arith.select %58, %59, %60 : vector<16x16xi1>, vector<16x16xf32>
      %cst_38 = arith.constant dense<0.000000e+00> : vector<16xf32>
      %62 = vector.multi_reduction <add>, %61, %cst_38 [1] : vector<16x16xf32> to vector<16xf32>
      %63 = vector.shape_cast %62 : vector<16xf32> to vector<16x1xf32>
      %64 = vector.broadcast %cst_18 : f32 to vector<16x1xf32>
      %65 = arith.cmpf oge, %63, %64 : vector<16x1xf32>
      %66 = arith.select %65, %56, %arg19 : vector<16x1xi1>, vector<16x1xf32>
      %67 = arith.select %65, %arg20, %56 : vector<16x1xi1>, vector<16x1xf32>
      scf.yield %66, %67 : vector<16x1xf32>, vector<16x1xf32>
    }
    %32 = vector.broadcast %31#0 : vector<16x1xf32> to vector<16x16xf32>
    %33 = arith.cmpf oge, %20, %32 : vector<16x16xf32>
    %cst_20 = arith.constant 0.000000e+00 : f32
    %34 = vector.broadcast %cst_20 : f32 to vector<16x16xf32>
    %35 = arith.select %33, %25, %34 : vector<16x16xi1>, vector<16x16xf32>
    %cst_21 = arith.constant dense<0.000000e+00> : vector<16xf32>
    %36 = vector.multi_reduction <add>, %35, %cst_21 [1] : vector<16x16xf32> to vector<16xf32>
    %37 = vector.shape_cast %36 : vector<16xf32> to vector<16x1xf32>
    %38 = tpu.reciprocal %37 : vector<16x1xf32> -> vector<16x1xf32>
    %39 = vector.broadcast %38 : vector<16x1xf32> to vector<16x16xf32>
    %40 = arith.mulf %35, %39 : vector<16x16xf32>
    %c0_22 = arith.constant 0 : index
    %c0_23 = arith.constant 0 : index
    %c0_24 = arith.constant 0 : index
    %c0_25 = arith.constant 0 : index
    %41 = vector.load %arg15[%c0_22, %c0_23, %c0_24, %c0_25] : memref<1x1x16x16xf32, #tpu.memory_space<vmem>>, vector<1x1x16x16xf32>
    %42 = vector.shape_cast %41 : vector<1x1x16x16xf32> to vector<16x16xf32>
    %43 = vector.shape_cast %40 : vector<16x16xf32> to vector<1x1x16x16xf32>
    tpu.vector_store %arg15[%c0_22, %c0_23, %c0_24, %c0_25], %43 {strides = array<i32>} : memref<1x1x16x16xf32, #tpu.memory_space<vmem>>, vector<1x1x16x16xf32>,
    %cst_26 = arith.constant dense<0.000000e+00> : vector<16x8xf32>
    %44 = tpu.matmul %40, %8, %cst_26 {dimension_numbers = #tpu.dot_dimension_numbers<[1], [0], [0], [1], [0, 0, 1, 1], [], []>} : vector<16x16xf32>, vector<16x8xf32>, vector<16x8xf32> -> vector<16x8xf32>
    %c0_27 = arith.constant 0 : index
    %c0_28 = arith.constant 0 : index
    %c0_29 = arith.constant 0 : index
    %45 = vector.load %arg12[%c0_27, %c0_28, %c0_29] : memref<1x8x32xf32, #tpu.memory_space<vmem>>, vector<1x8x32xf32>
    %46 = vector.shape_cast %45 : vector<1x8x32xf32> to vector<8x32xf32>
    %cst_30 = arith.constant dense<0.000000e+00> : vector<16x32xf32>
    %47 = tpu.matmul %44, %46, %cst_30 {dimension_numbers = #tpu.dot_dimension_numbers<[1], [0], [0], [1], [0, 0, 1, 1], [], []>} : vector<16x8xf32>, vector<8x32xf32>, vector<16x32xf32> -> vector<16x32xf32>
    %c0_i32_31 = arith.constant 0 : i32
    %48 = arith.cmpi eq, %arg2, %c0_i32_31 : i32
    %49 = arith.extui %48 : i1 to i32
    %c0_i32_32 = arith.constant 0 : i32
    %50 = arith.cmpi ne, %49, %c0_i32_32 : i32
    scf.if %50 {
      %c0_35 = arith.constant 0 : index
      %c0_36 = arith.constant 0 : index
      %54 = vector.load %arg13[%c0_35, %c0_36] : memref<1x32xf32, #tpu.memory_space<vmem>>, vector<1x32xf32>
      %55 = vector.broadcast %54 : vector<1x32xf32> to vector<16x32xf32>
      %56 = arith.addf %47, %55 : vector<16x32xf32>
      %c0_37 = arith.constant 0 : index
      %c0_38 = arith.constant 0 : index
      %c0_39 = arith.constant 0 : index
      %57 = vector.load %arg14[%c0_37, %c0_38, %c0_39] : memref<1x16x32xf32, #tpu.memory_space<vmem>>, vector<1x16x32xf32>
      %58 = vector.shape_cast %57 : vector<1x16x32xf32> to vector<16x32xf32>
      %59 = vector.shape_cast %56 : vector<16x32xf32> to vector<1x16x32xf32>
      tpu.vector_store %arg14[%c0_37, %c0_38, %c0_39], %59 {strides = array<i32>} : memref<1x16x32xf32, #tpu.memory_space<vmem>>, vector<1x16x32xf32>,
    } else {
    }
    %c0_i32_33 = arith.constant 0 : i32
    %51 = arith.cmpi sgt, %arg2, %c0_i32_33 : i32
    %52 = arith.extui %51 : i1 to i32
    %c0_i32_34 = arith.constant 0 : i32
    %53 = arith.cmpi ne, %52, %c0_i32_34 : i32
    scf.if %53 {
      %c0_35 = arith.constant 0 : index
      %c0_36 = arith.constant 0 : index
      %c0_37 = arith.constant 0 : index
      %54 = vector.load %arg14[%c0_35, %c0_36, %c0_37] : memref<1x16x32xf32, #tpu.memory_space<vmem>>, vector<1x16x32xf32>
      %55 = vector.shape_cast %54 : vector<1x16x32xf32> to vector<16x32xf32>
      %56 = arith.addf %55, %47 : vector<16x32xf32>
      %c0_38 = arith.constant 0 : index
      %c0_39 = arith.constant 0 : index
      %c0_40 = arith.constant 0 : index
      %57 = vector.load %arg14[%c0_38, %c0_39, %c0_40] : memref<1x16x32xf32, #tpu.memory_space<vmem>>, vector<1x16x32xf32>
      %58 = vector.shape_cast %57 : vector<1x16x32xf32> to vector<16x32xf32>
      %59 = vector.shape_cast %56 : vector<16x32xf32> to vector<1x16x32xf32>
      tpu.vector_store %arg14[%c0_38, %c0_39, %c0_40], %59 {strides = array<i32>} : memref<1x16x32xf32, #tpu.memory_space<vmem>>, vector<1x16x32xf32>,
    } else {
    }
    return
  }
  func.func @transform_0(%arg0: i32, %arg1: i32, %arg2: i32) -> (i32, i32, i32) {
    %c0_i32 = arith.constant 0 : i32
    %c0_i32_0 = arith.constant 0 : i32
    return %arg0, %arg1, %c0_i32 : i32, i32, i32
  }
  func.func @transform_1(%arg0: i32, %arg1: i32, %arg2: i32) -> (i32, i32, i32) {
    %c0_i32 = arith.constant 0 : i32
    %c0_i32_0 = arith.constant 0 : i32
    %c0_i32_1 = arith.constant 0 : i32
    return %arg0, %c0_i32, %c0_i32_0 : i32, i32, i32
  }
  func.func @transform_2(%arg0: i32, %arg1: i32, %arg2: i32) -> (i32, i32, i32) {
    %c0_i32 = arith.constant 0 : i32
    %c0_i32_0 = arith.constant 0 : i32
    %c0_i32_1 = arith.constant 0 : i32
    return %arg0, %c0_i32, %c0_i32_0 : i32, i32, i32
  }
  func.func @transform_3(%arg0: i32, %arg1: i32, %arg2: i32) -> (i32, i32, i32) {
    %c0_i32 = arith.constant 0 : i32
    %c0_i32_0 = arith.constant 0 : i32
    %c0_i32_1 = arith.constant 0 : i32
    return %arg2, %c0_i32, %c0_i32_0 : i32, i32, i32
  }
  func.func @transform_4(%arg0: i32, %arg1: i32, %arg2: i32) -> (i32, i32, i32) {
    %c0_i32 = arith.constant 0 : i32
    %c0_i32_0 = arith.constant 0 : i32
    %c0_i32_1 = arith.constant 0 : i32
    return %arg2, %c0_i32, %c0_i32_0 : i32, i32, i32
  }
  func.func @transform_5(%arg0: i32, %arg1: i32, %arg2: i32) -> (i32, i32, i32) {
    %c0_i32 = arith.constant 0 : i32
    %c0_i32_0 = arith.constant 0 : i32
    %c0_i32_1 = arith.constant 0 : i32
    return %arg2, %c0_i32, %c0_i32_0 : i32, i32, i32
  }
  func.func @transform_6(%arg0: i32, %arg1: i32, %arg2: i32) -> (i32, i32, i32) {
    %c0_i32 = arith.constant 0 : i32
    %c0_i32_0 = arith.constant 0 : i32
    %c0_i32_1 = arith.constant 0 : i32
    return %arg2, %c0_i32, %c0_i32_0 : i32, i32, i32
  }
  func.func @transform_7(%arg0: i32, %arg1: i32, %arg2: i32) -> (i32, i32, i32) {
    %c0_i32 = arith.constant 0 : i32
    %c0_i32_0 = arith.constant 0 : i32
    %c0_i32_1 = arith.constant 0 : i32
    return %arg2, %c0_i32, %c0_i32_0 : i32, i32, i32
  }
  func.func @transform_8(%arg0: i32, %arg1: i32, %arg2: i32) -> (i32, i32, i32) {
    %c0_i32 = arith.constant 0 : i32
    %c0_i32_0 = arith.constant 0 : i32
    %c0_i32_1 = arith.constant 0 : i32
    return %arg2, %c0_i32, %c0_i32_0 : i32, i32, i32
  }
  func.func @transform_9(%arg0: i32, %arg1: i32, %arg2: i32) -> (i32, i32, i32) {
    %c0_i32 = arith.constant 0 : i32
    %c0_i32_0 = arith.constant 0 : i32
    %c0_i32_1 = arith.constant 0 : i32
    return %arg2, %c0_i32, %c0_i32_0 : i32, i32, i32
  }
  func.func @transform_10(%arg0: i32, %arg1: i32, %arg2: i32) -> (i32, i32) {
    %c0_i32 = arith.constant 0 : i32
    %c0_i32_0 = arith.constant 0 : i32
    %c0_i32_1 = arith.constant 0 : i32
    return %c0_i32, %c0_i32_0 : i32, i32
  }
  func.func @transform_11(%arg0: i32, %arg1: i32, %arg2: i32) -> (i32, i32, i32) {
    %c0_i32 = arith.constant 0 : i32
    %c0_i32_0 = arith.constant 0 : i32
    return %arg0, %arg1, %c0_i32 : i32, i32, i32
  }
  func.func @transform_12(%arg0: i32, %arg1: i32, %arg2: i32) -> (i32, i32, i32, i32) {
    %c0_i32 = arith.constant 0 : i32
    %c0_i32_0 = arith.constant 0 : i32
    return %arg0, %arg2, %arg1, %c0_i32 : i32, i32, i32, i32
  }
}

</mosaic_0001>

<llo_original>
// kernel: tpu_custom_call.1
$region0: #{tpu_custom_call.1}
  #allocation0 [shape = 'u32[]', space=smem, size = 0x4, offset = 0x4, fixed_abs, tag = 'smem constant byte address 0x4 - core index']
  #allocation1 [shape = 'u32[144,128]{1,0:T(1,128)}', space=vmem, size = 0x12000, scoped, tag = 'internal scratch']
  #allocation2 [shape = 'f32[4,16,8]{2,1,0:T(8,128)}', space=vmem, size = 0x8000, scoped, tag = 'scratch operand']
  #allocation3 [shape = 'f32[4,16,8]{2,1,0:T(8,128)}', space=vmem, size = 0x8000, scoped, tag = 'scratch operand']
  %s0 = inlined_call_operand.vmem [shape: f32[2,16,32], index: 0, kind: input, shape index: {}]
  %s1 = inlined_call_operand.vmem [shape: f32[2,16,32], index: 1, kind: input, shape index: {}]
  %s2 = inlined_call_operand.vmem [shape: f32[2,16,32], index: 2, kind: input, shape index: {}]
  %s3 = inlined_call_operand.vmem [shape: f32[4,32,8], index: 3, kind: input, shape index: {}]
  %s4 = inlined_call_operand.vmem [shape: f32[4,1,8], index: 4, kind: input, shape index: {}]
  %s5 = inlined_call_operand.vmem [shape: f32[4,32,8], index: 5, kind: input, shape index: {}]
  %s6 = inlined_call_operand.vmem [shape: f32[4,1,8], index: 6, kind: input, shape index: {}]
  %s7 = inlined_call_operand.vmem [shape: f32[4,32,8], index: 7, kind: input, shape index: {}]
  %s8 = inlined_call_operand.vmem [shape: f32[4,1,8], index: 8, kind: input, shape index: {}]
  %s9 = inlined_call_operand.vmem [shape: f32[4,8,32], index: 9, kind: input, shape index: {}]
  %s10 = inlined_call_operand.vmem [shape: f32[1,32], index: 10, kind: input, shape index: {}]
  %s11 = inlined_call_operand.hbm [shape: f32[2,16,32], index: 11, kind: output, shape index: {0}]
  %s12 = inlined_call_operand.hbm [shape: f32[2,4,16,16], index: 12, kind: output, shape index: {1}]
  %13 = xla_tuple %s11, %s12
  %s14 = sld [smem:[#allocation0]]
  $region104: #{tpu_custom_call.1} parent=0
    _
  %s16 = ssub.s32 1, %s14
  %s17 = scalar_select 0, %s16, %s14
  $region1: #{tpu_custom_call.1} parent=0
    #allocation4 [shape = 'u8[16384]{0}', space=vmem, size = 0x4000, scoped, tag = 'output window, operand 0']
    #allocation5 [shape = 's32[2]{0}', space=sflag, size = 0x8, scoped, tag = 'scoped memory for tpu_custom_call.1']
    #allocation6 [shape = 'u8[16384]{0}', space=vmem, size = 0x4000, scoped, tag = 'output window, operand 1']
    #allocation7 [shape = 's32[2]{0}', space=sflag, size = 0x8, scoped, tag = 'scoped memory for tpu_custom_call.1']
    %18 = vsyncpa [#allocation5], 0
    %s19 = scalar_lea.sflag [#allocation5], 1
    %20 = vsyncpa %s19, 0
    %21 = vsyncpa [#allocation7], 0
    %s22 = scalar_lea.sflag [#allocation7], 1
    %23 = vsyncpa %s22, 0
    loop: start=0, step=1, limit=10
    $region2: #{tpu_custom_call.1} parent=1 // loop_pre_header
      _
    $region3: #{tpu_custom_call.1} parent=1 // loop_header
      %s25 = sphi 0, %s29
      %p26 = scmp.ge.s32.totalorder %s25, 10
      %s32 = sphi 0, %s51
      %s33 = sphi 0, %s47
      %s34 = sphi 0, %s43
      %s35 = sphi 0, %s32
      %s36 = sphi 0, %s33
      %s37 = sphi 0, %s34
      %s38 = sphi 0, %s35
      %s39 = sphi 0, %s36
      %s40 = sphi 0, %s37
      %s56 = sphi 0, %s58
      %s59 = sphi 0, %s56
      %s60 = sphi 0, %s59
      %s76 = sphi 0, %s60
      %s82 = sphi 0, %s84
      %s85 = sphi 0, %s82
      %s86 = sphi 0, %s85
      %s102 = sphi 0, %s86
      %s108 = sphi 0, %s110
      %s111 = sphi 0, %s108
      %s112 = sphi 0, %s111
      %s128 = sphi 0, %s112
      %s134 = sphi 0, %s136
      %s137 = sphi 0, %s134
      %s138 = sphi 0, %s137
      %s154 = sphi 0, %s138
      %s160 = sphi 0, %s162
      %s163 = sphi 0, %s160
      %s164 = sphi 0, %s163
      %s180 = sphi 0, %s164
      %s186 = sphi 0, %s188
      %s189 = sphi 0, %s186
      %s190 = sphi 0, %s189
      %s206 = sphi 0, %s190
      %s212 = sphi 0, %s214
      %s215 = sphi 0, %s212
      %s216 = sphi 0, %s215
      %s232 = sphi 0, %s216
      %s238 = sphi 0, %s240
      %s241 = sphi 0, %s238
      %s242 = sphi 0, %s241
      %s258 = sphi 0, %s242
      %s264 = sphi 0, %s266
      %s267 = sphi 0, %s264
      %s268 = sphi 0, %s267
      %s284 = sphi 0, %s268
      %s290 = sphi 0, %s292
      %s293 = sphi 0, %s290
      %s294 = sphi 0, %s293
      %s310 = sphi 0, %s294
      %s314 = sphi 0, %s314
      %s316 = sphi 0, %s314
      %s317 = sphi 0, %s316
      %s331 = sphi 0, %s317
      %s339 = sphi 0, %s341
      %s342 = sphi 0, %s339
      %s343 = sphi 0, %s342
      %s359 = sphi 0, %s343
      %s369 = sphi 0, %s371
      %s372 = sphi 0, %s369
      %s373 = sphi 0, %s372
      %s389 = sphi 0, %s373
    $region4: #{tpu_custom_call.1} parent=1 // loop_header_branch
      %28 = sbr.rel (%p26) target = $region8
    $region5: #{tpu_custom_call.1} parent=1 // loop_body
      %s30 = ssub.s32 %s25, 1
      %s31 = ssub.s32 %s25, 2
      %s41 = sadd.s32 1, %s34
      %p42 = scmp.ge.s32.totalorder %s41, 4
      %s43 = scalar_select %p42, 0, %s41
      %s44 = sadd.s32 1, %s33
      %s45 = scalar_select %p42, %s44, %s33
      %p46 = scmp.ge.s32.totalorder %s45, 1
      %s47 = scalar_select %p46, 0, %s45
      %s48 = sadd.s32 1, %s32
      %s49 = scalar_select %p46, %s48, %s32
      %p50 = scmp.ge.s32.totalorder %s49, 2
      %s51 = scalar_select %p50, 0, %s49
      %s52 = ssub.s32 %s32, %s51
      %s53 = ssub.s32 %s33, %s47
      %s54 = sor.u32 %s52, %s53
      %p55 = scmp.eq.s32.totalorder %s54, 0
      %s57 = sadd.s32 %s56, 1
      %s58 = scalar_select %p55, %s56, %s57
      %p61 = pneg %p55
      %p62 = scmp.eq.s32.totalorder %s25, 7
      %p63 = por %p61, %p62
      %p64 = scmp.ne.s32.totalorder %s56, %s59
      %p65 = scmp.eq.s32.totalorder %s25, 0
      %p66 = por %p64, %p65
      %p67 = scmp.ne.s32.totalorder %s56, %s59
      %p68 = scmp.eq.s32.totalorder %s30, 7
      %p69 = por %p67, %p68
      %p70 = scmp.ne.s32.totalorder %s59, %s60
      %p71 = scmp.eq.s32.totalorder %s30, 0
      %p72 = por %p70, %p71
      %p73 = scmp.ne.s32.totalorder %s59, %s60
      %p74 = scmp.eq.s32.totalorder %s31, 7
      %p75 = por %p73, %p74
      %p77 = scmp.ne.s32.totalorder %s60, %s76
      %p78 = scmp.eq.s32.totalorder %s31, 0
      %p79 = por %p77, %p78
      %s80 = ssub.s32 %s32, %s51
      %p81 = scmp.eq.s32.totalorder %s80, 0
      %s83 = sadd.s32 %s82, 1
      %s84 = scalar_select %p81, %s82, %s83
      %p87 = pneg %p81
      %p88 = scmp.eq.s32.totalorder %s25, 7
      %p89 = por %p87, %p88
      %p90 = scmp.ne.s32.totalorder %s82, %s85
      %p91 = scmp.eq.s32.totalorder %s25, 0
      %p92 = por %p90, %p91
      %p93 = scmp.ne.s32.totalorder %s82, %s85
      %p94 = scmp.eq.s32.totalorder %s30, 7
      %p95 = por %p93, %p94
      %p96 = scmp.ne.s32.totalorder %s85, %s86
      %p97 = scmp.eq.s32.totalorder %s30, 0
      %p98 = por %p96, %p97
      %p99 = scmp.ne.s32.totalorder %s85, %s86
      %p100 = scmp.eq.s32.totalorder %s31, 7
      %p101 = por %p99, %p100
      %p103 = scmp.ne.s32.totalorder %s86, %s102
      %p104 = scmp.eq.s32.totalorder %s31, 0
      %p105 = por %p103, %p104
      %s106 = ssub.s32 %s32, %s51
      %p107 = scmp.eq.s32.totalorder %s106, 0
      %s109 = sadd.s32 %s108, 1
      %s110 = scalar_select %p107, %s108, %s109
      %p113 = pneg %p107
      %p114 = scmp.eq.s32.totalorder %s25, 7
      %p115 = por %p113, %p114
      %p116 = scmp.ne.s32.totalorder %s108, %s111
      %p117 = scmp.eq.s32.totalorder %s25, 0
      %p118 = por %p116, %p117
      %p119 = scmp.ne.s32.totalorder %s108, %s111
      %p120 = scmp.eq.s32.totalorder %s30, 7
      %p121 = por %p119, %p120
      %p122 = scmp.ne.s32.totalorder %s111, %s112
      %p123 = scmp.eq.s32.totalorder %s30, 0
      %p124 = por %p122, %p123
      %p125 = scmp.ne.s32.totalorder %s111, %s112
      %p126 = scmp.eq.s32.totalorder %s31, 7
      %p127 = por %p125, %p126
      %p129 = scmp.ne.s32.totalorder %s112, %s128
      %p130 = scmp.eq.s32.totalorder %s31, 0
      %p131 = por %p129, %p130
      %s132 = ssub.s32 %s34, %s43
      %p133 = scmp.eq.s32.totalorder %s132, 0
      %s135 = sadd.s32 %s134, 1
      %s136 = scalar_select %p133, %s134, %s135
      %p139 = pneg %p133
      %p140 = scmp.eq.s32.totalorder %s25, 7
      %p141 = por %p139, %p140
      %p142 = scmp.ne.s32.totalorder %s134, %s137
      %p143 = scmp.eq.s32.totalorder %s25, 0
      %p144 = por %p142, %p143
      %p145 = scmp.ne.s32.totalorder %s134, %s137
      %p146 = scmp.eq.s32.totalorder %s30, 7
      %p147 = por %p145, %p146
      %p148 = scmp.ne.s32.totalorder %s137, %s138
      %p149 = scmp.eq.s32.totalorder %s30, 0
      %p150 = por %p148, %p149
      %p151 = scmp.ne.s32.totalorder %s137, %s138
      %p152 = scmp.eq.s32.totalorder %s31, 7
      %p153 = por %p151, %p152
      %p155 = scmp.ne.s32.totalorder %s138, %s154
      %p156 = scmp.eq.s32.totalorder %s31, 0
      %p157 = por %p155, %p156
      %s158 = ssub.s32 %s34, %s43
      %p159 = scmp.eq.s32.totalorder %s158, 0
      %s161 = sadd.s32 %s160, 1
      %s162 = scalar_select %p159, %s160, %s161
      %p165 = pneg %p159
      %p166 = scmp.eq.s32.totalorder %s25, 7
      %p167 = por %p165, %p166
      %p168 = scmp.ne.s32.totalorder %s160, %s163
      %p169 = scmp.eq.s32.totalorder %s25, 0
      %p170 = por %p168, %p169
      %p171 = scmp.ne.s32.totalorder %s160, %s163
      %p172 = scmp.eq.s32.totalorder %s30, 7
      %p173 = por %p171, %p172
      %p174 = scmp.ne.s32.totalorder %s163, %s164
      %p175 = scmp.eq.s32.totalorder %s30, 0
      %p176 = por %p174, %p175
      %p177 = scmp.ne.s32.totalorder %s163, %s164
      %p178 = scmp.eq.s32.totalorder %s31, 7
      %p179 = por %p177, %p178
      %p181 = scmp.ne.s32.totalorder %s164, %s180
      %p182 = scmp.eq.s32.totalorder %s31, 0
      %p183 = por %p181, %p182
      %s184 = ssub.s32 %s34, %s43
      %p185 = scmp.eq.s32.totalorder %s184, 0
      %s187 = sadd.s32 %s186, 1
      %s188 = scalar_select %p185, %s186, %s187
      %p191 = pneg %p185
      %p192 = scmp.eq.s32.totalorder %s25, 7
      %p193 = por %p191, %p192
      %p194 = scmp.ne.s32.totalorder %s186, %s189
      %p195 = scmp.eq.s32.totalorder %s25, 0
      %p196 = por %p194, %p195
      %p197 = scmp.ne.s32.totalorder %s186, %s189
      %p198 = scmp.eq.s32.totalorder %s30, 7
      %p199 = por %p197, %p198
      %p200 = scmp.ne.s32.totalorder %s189, %s190
      %p201 = scmp.eq.s32.totalorder %s30, 0
      %p202 = por %p200, %p201
      %p203 = scmp.ne.s32.totalorder %s189, %s190
      %p204 = scmp.eq.s32.totalorder %s31, 7
      %p205 = por %p203, %p204
      %p207 = scmp.ne.s32.totalorder %s190, %s206
      %p208 = scmp.eq.s32.totalorder %s31, 0
      %p209 = por %p207, %p208
      %s210 = ssub.s32 %s34, %s43
      %p211 = scmp.eq.s32.totalorder %s210, 0
      %s213 = sadd.s32 %s212, 1
      %s214 = scalar_select %p211, %s212, %s213
      %p217 = pneg %p211
      %p218 = scmp.eq.s32.totalorder %s25, 7
      %p219 = por %p217, %p218
      %p220 = scmp.ne.s32.totalorder %s212, %s215
      %p221 = scmp.eq.s32.totalorder %s25, 0
      %p222 = por %p220, %p221
      %p223 = scmp.ne.s32.totalorder %s212, %s215
      %p224 = scmp.eq.s32.totalorder %s30, 7
      %p225 = por %p223, %p224
      %p226 = scmp.ne.s32.totalorder %s215, %s216
      %p227 = scmp.eq.s32.totalorder %s30, 0
      %p228 = por %p226, %p227
      %p229 = scmp.ne.s32.totalorder %s215, %s216
      %p230 = scmp.eq.s32.totalorder %s31, 7
      %p231 = por %p229, %p230
      %p233 = scmp.ne.s32.totalorder %s216, %s232
      %p234 = scmp.eq.s32.totalorder %s31, 0
      %p235 = por %p233, %p234
      %s236 = ssub.s32 %s34, %s43
      %p237 = scmp.eq.s32.totalorder %s236, 0
      %s239 = sadd.s32 %s238, 1
      %s240 = scalar_select %p237, %s238, %s239
      %p243 = pneg %p237
      %p244 = scmp.eq.s32.totalorder %s25, 7
      %p245 = por %p243, %p244
      %p246 = scmp.ne.s32.totalorder %s238, %s241
      %p247 = scmp.eq.s32.totalorder %s25, 0
      %p248 = por %p246, %p247
      %p249 = scmp.ne.s32.totalorder %s238, %s241
      %p250 = scmp.eq.s32.totalorder %s30, 7
      %p251 = por %p249, %p250
      %p252 = scmp.ne.s32.totalorder %s241, %s242
      %p253 = scmp.eq.s32.totalorder %s30, 0
      %p254 = por %p252, %p253
      %p255 = scmp.ne.s32.totalorder %s241, %s242
      %p256 = scmp.eq.s32.totalorder %s31, 7
      %p257 = por %p255, %p256
      %p259 = scmp.ne.s32.totalorder %s242, %s258
      %p260 = scmp.eq.s32.totalorder %s31, 0
      %p261 = por %p259, %p260
      %s262 = ssub.s32 %s34, %s43
      %p263 = scmp.eq.s32.totalorder %s262, 0
      %s265 = sadd.s32 %s264, 1
      %s266 = scalar_select %p263, %s264, %s265
      %p269 = pneg %p263
      %p270 = scmp.eq.s32.totalorder %s25, 7
      %p271 = por %p269, %p270
      %p272 = scmp.ne.s32.totalorder %s264, %s267
      %p273 = scmp.eq.s32.totalorder %s25, 0
      %p274 = por %p272, %p273
      %p275 = scmp.ne.s32.totalorder %s264, %s267
      %p276 = scmp.eq.s32.totalorder %s30, 7
      %p277 = por %p275, %p276
      %p278 = scmp.ne.s32.totalorder %s267, %s268
      %p279 = scmp.eq.s32.totalorder %s30, 0
      %p280 = por %p278, %p279
      %p281 = scmp.ne.s32.totalorder %s267, %s268
      %p282 = scmp.eq.s32.totalorder %s31, 7
      %p283 = por %p281, %p282
      %p285 = scmp.ne.s32.totalorder %s268, %s284
      %p286 = scmp.eq.s32.totalorder %s31, 0
      %p287 = por %p285, %p286
      %s288 = ssub.s32 %s34, %s43
      %p289 = scmp.eq.s32.totalorder %s288, 0
      %s291 = sadd.s32 %s290, 1
      %s292 = scalar_select %p289, %s290, %s291
      %p295 = pneg %p289
      %p296 = scmp.eq.s32.totalorder %s25, 7
      %p297 = por %p295, %p296
      %p298 = scmp.ne.s32.totalorder %s290, %s293
      %p299 = scmp.eq.s32.totalorder %s25, 0
      %p300 = por %p298, %p299
      %p301 = scmp.ne.s32.totalorder %s290, %s293
      %p302 = scmp.eq.s32.totalorder %s30, 7
      %p303 = por %p301, %p302
      %p304 = scmp.ne.s32.totalorder %s293, %s294
      %p305 = scmp.eq.s32.totalorder %s30, 0
      %p306 = por %p304, %p305
      %p307 = scmp.ne.s32.totalorder %s293, %s294
      %p308 = scmp.eq.s32.totalorder %s31, 7
      %p309 = por %p307, %p308
      %p311 = scmp.ne.s32.totalorder %s294, %s310
      %p312 = scmp.eq.s32.totalorder %s31, 0
      %p313 = por %p311, %p312
      %s315 = sadd.s32 %s314, 1
      %p318 = scmp.eq.s32.totalorder %s25, 7
      %p319 = scmp.ne.s32.totalorder %s314, %s316
      %p320 = scmp.eq.s32.totalorder %s25, 0
      %p321 = por %p319, %p320
      %p322 = scmp.ne.s32.totalorder %s314, %s316
      %p323 = scmp.eq.s32.totalorder %s30, 7
      %p324 = por %p322, %p323
      %p325 = scmp.ne.s32.totalorder %s316, %s317
      %p326 = scmp.eq.s32.totalorder %s30, 0
      %p327 = por %p325, %p326
      %p328 = scmp.ne.s32.totalorder %s316, %s317
      %p329 = scmp.eq.s32.totalorder %s31, 7
      %p330 = por %p328, %p329
      %p332 = scmp.ne.s32.totalorder %s317, %s331
      %p333 = scmp.eq.s32.totalorder %s31, 0
      %p334 = por %p332, %p333
      %s335 = ssub.s32 %s32, %s51
      %s336 = ssub.s32 %s33, %s47
      %s337 = sor.u32 %s335, %s336
      %p338 = scmp.eq.s32.totalorder %s337, 0
      %s340 = sadd.s32 %s339, 1
      %s341 = scalar_select %p338, %s339, %s340
      %p344 = pneg %p338
      %p345 = scmp.eq.s32.totalorder %s25, 7
      %p346 = por %p344, %p345
      %p347 = scmp.ne.s32.totalorder %s339, %s342
      %p348 = scmp.eq.s32.totalorder %s25, 0
      %p349 = por %p347, %p348
      %p350 = scmp.ne.s32.totalorder %s339, %s342
      %p351 = scmp.eq.s32.totalorder %s30, 7
      %p352 = por %p350, %p351
      %p353 = scmp.ne.s32.totalorder %s342, %s343
      %p354 = scmp.eq.s32.totalorder %s30, 0
      %p355 = por %p353, %p354
      %p356 = scmp.ne.s32.totalorder %s342, %s343
      %p357 = scmp.eq.s32.totalorder %s31, 7
      %p358 = por %p356, %p357
      %p360 = scmp.ne.s32.totalorder %s343, %s359
      %p361 = scmp.eq.s32.totalorder %s31, 0
      %p362 = por %p360, %p361
      %s363 = ssub.s32 %s32, %s51
      %s364 = ssub.s32 %s34, %s43
      %s365 = sor.u32 %s363, %s364
      %s366 = ssub.s32 %s33, %s47
      %s367 = sor.u32 %s365, %s366
      %p368 = scmp.eq.s32.totalorder %s367, 0
      %s370 = sadd.s32 %s369, 1
      %s371 = scalar_select %p368, %s369, %s370
      %p374 = pneg %p368
      %p375 = scmp.eq.s32.totalorder %s25, 7
      %p376 = por %p374, %p375
      %p377 = scmp.ne.s32.totalorder %s369, %s372
      %p378 = scmp.eq.s32.totalorder %s25, 0
      %p379 = por %p377, %p378
      %p380 = scmp.ne.s32.totalorder %s369, %s372
      %p381 = scmp.eq.s32.totalorder %s30, 7
      %p382 = por %p380, %p381
      %p383 = scmp.ne.s32.totalorder %s372, %s373
      %p384 = scmp.eq.s32.totalorder %s30, 0
      %p385 = por %p383, %p384
      %p386 = scmp.ne.s32.totalorder %s372, %s373
      %p387 = scmp.eq.s32.totalorder %s31, 7
      %p388 = por %p386, %p387
      %p390 = scmp.ne.s32.totalorder %s373, %s389
      %p391 = scmp.eq.s32.totalorder %s31, 0
      %p392 = por %p390, %p391
      %p393 = scmp.le.s32.totalorder 1, %s25
      %p394 = scmp.lt.s32.totalorder %s25, 9
      %p395 = pnand %p393, %p394
      %p396 = pneg %p395
      // Predicated region
      $region9: #{tpu_custom_call.1} parent=5 // pred_check
        _
      $region10: #{tpu_custom_call.1} parent=5 // pred_check_branch
        %398 = sbr.rel (%p395) target = $region12
      $region11: #{tpu_custom_call.1} parent=5 // pred_region
        %s399 = ssub.s32 %s25, 1
        // Predicated region
        $region13: #{tpu_custom_call.1} parent=11 // pred_check
          %p400 = pneg %p327
        $region14: #{tpu_custom_call.1} parent=11 // pred_check_branch
          %402 = sbr.rel (%p400) target = $region16
        $region15: #{tpu_custom_call.1} parent=11 // pred_region
          _
        $region16: #{tpu_custom_call.1} parent=11 // pred_fallthru
          _
      $region12: #{tpu_custom_call.1} parent=5 // pred_fallthru
        _
      %p403 = scmp.lt.s32.totalorder %s25, 8
      // Predicated region
      $region17: #{tpu_custom_call.1} parent=5 // pred_check
        %p404 = pneg %p403
      $region18: #{tpu_custom_call.1} parent=5 // pred_check_branch
        %406 = sbr.rel (%p404) target = $region20
      $region19: #{tpu_custom_call.1} parent=5 // pred_region
        // Predicated region
        $region21: #{tpu_custom_call.1} parent=19 // pred_check
          %p407 = pneg %p66
        $region22: #{tpu_custom_call.1} parent=19 // pred_check_branch
          %409 = sbr.rel (%p407) target = $region24
        $region23: #{tpu_custom_call.1} parent=19 // pred_region
          %s410 = smul.u32 2, %s33
          %p411 = scmp.lt.s32.totalorder %s32, 1
          %s412 = scalar_select %p411, %s32, 1
          %p413 = scmp.lt.s32.totalorder %s410, 1
          %s414 = scalar_select %p413, %s410, 1
          %s415 = smul.addr %s412, 2
          %s416 = sadd.s32 %s414, %s415
          %s417 = smul.addr %s416, 8
          %s418 = scalar_lea.vmem %s0, %s417
          %s419 = smul.u32 2, %s33
        $region24: #{tpu_custom_call.1} parent=19 // pred_fallthru
          _
        // Predicated region
        $region25: #{tpu_custom_call.1} parent=19 // pred_check
          %p420 = pneg %p92
        $region26: #{tpu_custom_call.1} parent=19 // pred_check_branch
          %422 = sbr.rel (%p420) target = $region28
        $region27: #{tpu_custom_call.1} parent=19 // pred_region
          %p423 = scmp.lt.s32.totalorder %s32, 1
          %s424 = scalar_select %p423, %s32, 1
          %s425 = smul.addr %s424, 2
          %s426 = smul.addr %s425, 8
          %s427 = scalar_lea.vmem %s1, %s426
        $region28: #{tpu_custom_call.1} parent=19 // pred_fallthru
          _
        // Predicated region
        $region29: #{tpu_custom_call.1} parent=19 // pred_check
          %p428 = pneg %p118
        $region30: #{tpu_custom_call.1} parent=19 // pred_check_branch
          %430 = sbr.rel (%p428) target = $region32
        $region31: #{tpu_custom_call.1} parent=19 // pred_region
          %p431 = scmp.lt.s32.totalorder %s32, 1
          %s432 = scalar_select %p431, %s32, 1
          %s433 = smul.addr %s432, 2
          %s434 = smul.addr %s433, 8
          %s435 = scalar_lea.vmem %s2, %s434
        $region32: #{tpu_custom_call.1} parent=19 // pred_fallthru
          _
        // Predicated region
        $region33: #{tpu_custom_call.1} parent=19 // pred_check
          %p436 = pneg %p144
        $region34: #{tpu_custom_call.1} parent=19 // pred_check_branch
          %438 = sbr.rel (%p436) target = $region36
        $region35: #{tpu_custom_call.1} parent=19 // pred_region
          %p439 = scmp.lt.s32.totalorder %s34, 3
          %s440 = scalar_select %p439, %s34, 3
          %s441 = smul.addr %s440, 4
          %s442 = smul.addr %s441, 8
          %s443 = scalar_lea.vmem %s3, %s442
        $region36: #{tpu_custom_call.1} parent=19 // pred_fallthru
          _
        // Predicated region
        $region37: #{tpu_custom_call.1} parent=19 // pred_check
          %p444 = pneg %p170
        $region38: #{tpu_custom_call.1} parent=19 // pred_check_branch
          %446 = sbr.rel (%p444) target = $region40
        $region39: #{tpu_custom_call.1} parent=19 // pred_region
          %p447 = scmp.lt.s32.totalorder %s34, 3
          %s448 = scalar_select %p447, %s34, 3
          %s449 = scalar_lea.vmem %s4, %s448
        $region40: #{tpu_custom_call.1} parent=19 // pred_fallthru
          _
        // Predicated region
        $region41: #{tpu_custom_call.1} parent=19 // pred_check
          %p450 = pneg %p196
        $region42: #{tpu_custom_call.1} parent=19 // pred_check_branch
          %452 = sbr.rel (%p450) target = $region44
        $region43: #{tpu_custom_call.1} parent=19 // pred_region
          %p453 = scmp.lt.s32.totalorder %s34, 3
          %s454 = scalar_select %p453, %s34, 3
          %s455 = smul.addr %s454, 4
          %s456 = smul.addr %s455, 8
          %s457 = scalar_lea.vmem %s5, %s456
        $region44: #{tpu_custom_call.1} parent=19 // pred_fallthru
          _
        // Predicated region
        $region45: #{tpu_custom_call.1} parent=19 // pred_check
          %p458 = pneg %p222
        $region46: #{tpu_custom_call.1} parent=19 // pred_check_branch
          %460 = sbr.rel (%p458) target = $region48
        $region47: #{tpu_custom_call.1} parent=19 // pred_region
          %p461 = scmp.lt.s32.totalorder %s34, 3
          %s462 = scalar_select %p461, %s34, 3
          %s463 = scalar_lea.vmem %s6, %s462
        $region48: #{tpu_custom_call.1} parent=19 // pred_fallthru
          _
        // Predicated region
        $region49: #{tpu_custom_call.1} parent=19 // pred_check
          %p464 = pneg %p248
        $region50: #{tpu_custom_call.1} parent=19 // pred_check_branch
          %466 = sbr.rel (%p464) target = $region52
        $region51: #{tpu_custom_call.1} parent=19 // pred_region
          %p467 = scmp.lt.s32.totalorder %s34, 3
          %s468 = scalar_select %p467, %s34, 3
          %s469 = smul.addr %s468, 4
          %s470 = smul.addr %s469, 8
          %s471 = scalar_lea.vmem %s7, %s470
        $region52: #{tpu_custom_call.1} parent=19 // pred_fallthru
          _
        // Predicated region
        $region53: #{tpu_custom_call.1} parent=19 // pred_check
          %p472 = pneg %p274
        $region54: #{tpu_custom_call.1} parent=19 // pred_check_branch
          %474 = sbr.rel (%p472) target = $region56
        $region55: #{tpu_custom_call.1} parent=19 // pred_region
          %p475 = scmp.lt.s32.totalorder %s34, 3
          %s476 = scalar_select %p475, %s34, 3
          %s477 = scalar_lea.vmem %s8, %s476
        $region56: #{tpu_custom_call.1} parent=19 // pred_fallthru
          _
        // Predicated region
        $region57: #{tpu_custom_call.1} parent=19 // pred_check
          %p478 = pneg %p300
        $region58: #{tpu_custom_call.1} parent=19 // pred_check_branch
          %480 = sbr.rel (%p478) target = $region60
        $region59: #{tpu_custom_call.1} parent=19 // pred_region
          %p481 = scmp.lt.s32.totalorder %s34, 3
          %s482 = scalar_select %p481, %s34, 3
          %s483 = smul.addr %s482, 8
          %s484 = scalar_lea.vmem %s9, %s483
        $region60: #{tpu_custom_call.1} parent=19 // pred_fallthru
          _
      $region20: #{tpu_custom_call.1} parent=5 // pred_fallthru
        _
      %p485 = scmp.le.s32.totalorder 1, %s25
      %p486 = scmp.lt.s32.totalorder %s25, 9
      %p487 = pnand %p485, %p486
      %p488 = pneg %p487
      // Predicated region
      $region61: #{tpu_custom_call.1} parent=5 // pred_check
        _
      $region62: #{tpu_custom_call.1} parent=5 // pred_check_branch
        %490 = sbr.rel (%p487) target = $region64
      $region63: #{tpu_custom_call.1} parent=5 // pred_region
        %s491 = ssub.s32 %s25, 1
        %s492 = smul.u32 2, %s36
        %p493 = scmp.lt.s32.totalorder %s35, 1
        %s494 = scalar_select %p493, %s35, 1
        %p495 = scmp.lt.s32.totalorder %s492, 1
        %s496 = scalar_select %p495, %s492, 1
        %s497 = smul.addr %s494, 2
        %s498 = sadd.s32 %s496, %s497
        %s499 = smul.addr %s498, 8
        %s500 = scalar_lea.vmem %s0, %s499
        %p501 = pneg %p72
        %p502 = pneg %p69
        %p503 = scmp.lt.s32.totalorder %s35, 1
        %s504 = scalar_select %p503, %s35, 1
        %s505 = smul.addr %s504, 2
        %s506 = smul.addr %s505, 8
        %s507 = scalar_lea.vmem %s1, %s506
        %p508 = pneg %p98
        %p509 = pneg %p95
        %p510 = scmp.lt.s32.totalorder %s35, 1
        %s511 = scalar_select %p510, %s35, 1
        %s512 = smul.addr %s511, 2
        %s513 = smul.addr %s512, 8
        %s514 = scalar_lea.vmem %s2, %s513
        %p515 = pneg %p124
        %p516 = pneg %p121
        %p517 = scmp.lt.s32.totalorder %s37, 3
        %s518 = scalar_select %p517, %s37, 3
        %s519 = smul.addr %s518, 4
        %s520 = smul.addr %s519, 8
        %s521 = scalar_lea.vmem %s3, %s520
        %p522 = pneg %p150
        %p523 = pneg %p147
        %p524 = scmp.lt.s32.totalorder %s37, 3
        %s525 = scalar_select %p524, %s37, 3
        %s526 = scalar_lea.vmem %s4, %s525
        %p527 = pneg %p176
        %p528 = pneg %p173
        %p529 = scmp.lt.s32.totalorder %s37, 3
        %s530 = scalar_select %p529, %s37, 3
        %s531 = smul.addr %s530, 4
        %s532 = smul.addr %s531, 8
        %s533 = scalar_lea.vmem %s5, %s532
        %p534 = pneg %p202
        %p535 = pneg %p199
        %p536 = scmp.lt.s32.totalorder %s37, 3
        %s537 = scalar_select %p536, %s37, 3
        %s538 = scalar_lea.vmem %s6, %s537
        %p539 = pneg %p228
        %p540 = pneg %p225
        %p541 = scmp.lt.s32.totalorder %s37, 3
        %s542 = scalar_select %p541, %s37, 3
        %s543 = smul.addr %s542, 4
        %s544 = smul.addr %s543, 8
        %s545 = scalar_lea.vmem %s7, %s544
        %p546 = pneg %p254
        %p547 = pneg %p251
        %p548 = scmp.lt.s32.totalorder %s37, 3
        %s549 = scalar_select %p548, %s37, 3
        %s550 = scalar_lea.vmem %s8, %s549
        %p551 = pneg %p280
        %p552 = pneg %p277
        %p553 = scmp.lt.s32.totalorder %s37, 3
        %s554 = scalar_select %p553, %s37, 3
        %s555 = smul.addr %s554, 8
        %s556 = scalar_lea.vmem %s9, %s555
        %p557 = pneg %p306
        %p558 = pneg %p303
        %p559 = pneg %p327
        %p560 = pneg %p324
        %p561 = pneg %p355
        %p562 = pneg %p352
        %s563 = sand.u32 %s342, 1
        %s564 = scalar_lea.sflag [#allocation5], %s563
        %s565 = sand.u32 %s342, 1
        %s566 = smul.addr %s565, 16
        %s567 = scalar_lea.vmem [#allocation4], %s566
        %p568 = pneg %p385
        %p569 = pneg %p382
        %s570 = sand.u32 %s372, 1
        %s571 = scalar_lea.sflag [#allocation7], %s570
        %s572 = sand.u32 %s372, 1
        %s573 = smul.addr %s572, 16
        %s574 = scalar_lea.vmem [#allocation6], %s573
        %s575 = smul.u32 2, %s36
        %p576 = scmp.lt.s32.totalorder %s35, 1
        %s577 = scalar_select %p576, %s35, 1
        %p578 = scmp.lt.s32.totalorder %s575, 1
        %s579 = scalar_select %p578, %s575, 1
        %s580 = smul.addr %s577, 2
        %s581 = sadd.s32 %s579, %s580
        %s582 = smul.addr %s581, 8
        %s583 = scalar_lea.vmem %s0, %s582
        %s584 = smul.u32 2, %s36
        %p585 = scmp.lt.s32.totalorder %s35, 1
        %s586 = scalar_select %p585, %s35, 1
        %s587 = smul.addr %s586, 2
        %s588 = smul.addr %s587, 8
        %s589 = scalar_lea.vmem %s1, %s588
        %p590 = scmp.lt.s32.totalorder %s35, 1
        %s591 = scalar_select %p590, %s35, 1
        %s592 = smul.addr %s591, 2
        %s593 = smul.addr %s592, 8
        %s594 = scalar_lea.vmem %s2, %s593
        %p595 = scmp.lt.s32.totalorder %s37, 3
        %s596 = scalar_select %p595, %s37, 3
        %s597 = smul.addr %s596, 4
        %s598 = smul.addr %s597, 8
        %s599 = scalar_lea.vmem %s3, %s598
        %p600 = scmp.lt.s32.totalorder %s37, 3
        %s601 = scalar_select %p600, %s37, 3
        %s602 = scalar_lea.vmem %s4, %s601
        %p603 = scmp.lt.s32.totalorder %s37, 3
        %s604 = scalar_select %p603, %s37, 3
        %s605 = smul.addr %s604, 4
        %s606 = smul.addr %s605, 8
        %s607 = scalar_lea.vmem %s5, %s606
        %p608 = scmp.lt.s32.totalorder %s37, 3
        %s609 = scalar_select %p608, %s37, 3
        %s610 = scalar_lea.vmem %s6, %s609
        %p611 = scmp.lt.s32.totalorder %s37, 3
        %s612 = scalar_select %p611, %s37, 3
        %s613 = smul.addr %s612, 4
        %s614 = smul.addr %s613, 8
        %s615 = scalar_lea.vmem %s7, %s614
        %p616 = scmp.lt.s32.totalorder %s37, 3
        %s617 = scalar_select %p616, %s37, 3
        %s618 = scalar_lea.vmem %s8, %s617
        %p619 = scmp.lt.s32.totalorder %s37, 3
        %s620 = scalar_select %p619, %s37, 3
        %s621 = smul.addr %s620, 8
        %s622 = scalar_lea.vmem %s9, %s621
        %s623 = smul.u32 2, %s36
        %s624 = smul.u32 2, %s36
        %p625 = scmp.eq.s32.totalorder %s36, 0
        // Predicated region
        $region65: #{tpu_custom_call.1} parent=63 // pred_check
          %p626 = pneg %p625
        $region66: #{tpu_custom_call.1} parent=63 // pred_check_branch
          %628 = sbr.rel (%p626) target = $region68
        $region67: #{tpu_custom_call.1} parent=63 // pred_region
          %v629 = vld [vmem:[%s589] sm:$0xff]
          %v630 = vld [vmem:[%s589 + $0x8] sm:$0xff]
          %v631 = vld [vmem:[%s594] sm:$0xff]
          %v632 = vld [vmem:[%s594 + $0x8] sm:$0xff]
          %v633 = vld [vmem:[%s607] sm:$0xff]
          %v634 = vld [vmem:[%s607 + $0x8] sm:$0xff]
          %v635 = vld [vmem:[%s607 + $0x10] sm:$0xff]
          %v636 = vld [vmem:[%s607 + $0x18] sm:$0xff]
          %v637 = vld [vmem:[%s610] sm:$0x1]
          %v639 = vlaneseq
          %v640 = vshrl.u32 %v639, 7
          %v641 = vsub.s32 0, %v640
          %v642 = vrot.slane %v637, %v641
          %vm644 = vcmask 261120
          %v646 = vsel %vm644, %v629, 0
          %v649 = vsel %vm644, %v630, 0
          %651 = vmatprep.subr.mxu0 0.0
          %652 = vmatpush1.msra.mxu0 %v633
          %653 = vmatprep.subr.mxu0 0.0
          %654 = vmatpush1.msra.mxu0 %v634
          %655 = vmatprep.subr.mxu0 0.0
          %656 = vmatpush1.msra.mxu0 %v635
          %657 = vmatprep.subr.mxu0 0.0
          %658 = vmatpush1.msra.mxu0 %v636
          %659 = vmatprep.subr.mxu0 0.0
          %660 = vmatpush1.msra.mxu0 0.0
          %661 = vmatprep.subr.mxu0 0.0
          %662 = vmatpush1.msra.mxu0 0.0
          %663 = vmatprep.subr.mxu0 0.0
          %664 = vmatpush1.msra.mxu0 0.0
          %665 = vmatprep.subr.mxu0 0.0
          %666 = vmatpush1.msra.mxu0 0.0
          %667 = vmatprep.subr.mxu0 0.0
          %668 = vmatpush1.msra.mxu0 0.0
          %669 = vmatprep.subr.mxu0 0.0
          %670 = vmatpush1.msra.mxu0 0.0
          %671 = vmatprep.subr.mxu0 0.0
          %672 = vmatpush1.msra.mxu0 0.0
          %673 = vmatprep.subr.mxu0 0.0
          %674 = vmatpush1.msra.mxu0 0.0
          %675 = vmatprep.subr.mxu0 0.0
          %676 = vmatpush1.msra.mxu0 0.0
          %677 = vmatprep.subr.mxu0 0.0
          %678 = vmatpush1.msra.mxu0 0.0
          %679 = vmatprep.subr.mxu0 0.0
          %680 = vmatpush1.msra.mxu0 0.0
          %681 = vmatprep.subr.mxu0 0.0
          %682 = vmatpush1.msra.mxu0 0.0
          %683 = vmatprep.subr.mxu0 0.0
          %684 = vmatpush1.msra.mxu0 0.0
          %685 = vmatprep.subr.mxu0 0.0
          %686 = vmatpush1.msra.mxu0 0.0
          %687 = vmatprep.subr.mxu0 0.0
          %688 = vmatpush1.msra.mxu0 0.0
          %689 = vmatprep.subr.mxu0 0.0
          %690 = vmatpush1.msra.mxu0 0.0
          %691 = vmatprep.subr.mxu0 0.0
          %692 = vmatpush1.msra.mxu0 0.0
          %693 = vmatprep.subr.mxu0 0.0
          %694 = vmatpush1.msra.mxu0 0.0
          %695 = vmatprep.subr.mxu0 0.0
          %696 = vmatpush1.msra.mxu0 0.0
          %697 = vmatprep.subr.mxu0 0.0
          %698 = vmatpush1.msra.mxu0 0.0
          %699 = vmatprep.subr.mxu0 0.0
          %700 = vmatpush1.msra.mxu0 0.0
          %701 = vmatprep.subr.mxu0 0.0
          %702 = vmatpush1.msra.mxu0 0.0
          %703 = vmatprep.subr.mxu0 0.0
          %704 = vmatpush1.msra.mxu0 0.0
          %705 = vmatprep.subr.mxu0 0.0
          %706 = vmatpush1.msra.mxu0 0.0
          %707 = vmatprep.subr.mxu0 0.0
          %708 = vmatpush1.msra.mxu0 0.0
          %709 = vmatprep.subr.mxu0 0.0
          %710 = vmatpush1.msra.mxu0 0.0
          %711 = vmatprep.subr.mxu0 0.0
          %712 = vmatpush1.msra.mxu0 0.0
          %713 = vmatprep.subr.mxu0 0.0
          %714 = vmatpush1.msra.mxu0 0.0
          %715 = vmatprep.mubr.f32.mxu0 0.0
          %716 = vmatmul.mubr.f32.gmra.mrb[0].mxu0 %v646
          %v717 = vpop.f32.mrb[0].mxu0
          %v718 = vadd.f32 %v642, %v717
          %v719 = vpop.f32.mrb[0].mxu0
          %720 = vmatprep.mubr.f32.mxu0 0.0
          %721 = vmatmul.mubr.f32.gmra.mrb[0].mxu0 %v649
          %v722 = vpop.f32.mrb[0].mxu0
          %v723 = vadd.f32 %v642, %v722
          %v724 = vpop.f32.mrb[0].mxu0
          %725 = vdwg.mxu0
          %s726 = smul.u32 %s37, 16
          %s727 = scalar_lea.vmem [#allocation2], %s726
          %vm728 = vcmask 64512
          %729 = vst.msk [vmem:[%s727] sm:$0xff] %vm728, %v718
          %730 = vst.msk [vmem:[%s727 + $0x8] sm:$0xff] %vm728, %v723
          %v731 = vld [vmem:[%s615] sm:$0xff]
          %v732 = vld [vmem:[%s615 + $0x8] sm:$0xff]
          %v733 = vld [vmem:[%s615 + $0x10] sm:$0xff]
          %v734 = vld [vmem:[%s615 + $0x18] sm:$0xff]
          %v735 = vld [vmem:[%s618] sm:$0x1]
          %v737 = vlaneseq
          %v738 = vshrl.u32 %v737, 7
          %v739 = vsub.s32 0, %v738
          %v740 = vrot.slane %v735, %v739
          %v743 = vsel %vm644, %v631, 0
          %v746 = vsel %vm644, %v632, 0
          %748 = vmatprep.subr.mxu0 0.0
          %749 = vmatpush1.msra.mxu0 %v731
          %750 = vmatprep.subr.mxu0 0.0
          %751 = vmatpush1.msra.mxu0 %v732
          %752 = vmatprep.subr.mxu0 0.0
          %753 = vmatpush1.msra.mxu0 %v733
          %754 = vmatprep.subr.mxu0 0.0
          %755 = vmatpush1.msra.mxu0 %v734
          %756 = vmatprep.subr.mxu0 0.0
          %757 = vmatpush1.msra.mxu0 0.0
          %758 = vmatprep.subr.mxu0 0.0
          %759 = vmatpush1.msra.mxu0 0.0
          %760 = vmatprep.subr.mxu0 0.0
          %761 = vmatpush1.msra.mxu0 0.0
          %762 = vmatprep.subr.mxu0 0.0
          %763 = vmatpush1.msra.mxu0 0.0
          %764 = vmatprep.subr.mxu0 0.0
          %765 = vmatpush1.msra.mxu0 0.0
          %766 = vmatprep.subr.mxu0 0.0
          %767 = vmatpush1.msra.mxu0 0.0
          %768 = vmatprep.subr.mxu0 0.0
          %769 = vmatpush1.msra.mxu0 0.0
          %770 = vmatprep.subr.mxu0 0.0
          %771 = vmatpush1.msra.mxu0 0.0
          %772 = vmatprep.subr.mxu0 0.0
          %773 = vmatpush1.msra.mxu0 0.0
          %774 = vmatprep.subr.mxu0 0.0
          %775 = vmatpush1.msra.mxu0 0.0
          %776 = vmatprep.subr.mxu0 0.0
          %777 = vmatpush1.msra.mxu0 0.0
          %778 = vmatprep.subr.mxu0 0.0
          %779 = vmatpush1.msra.mxu0 0.0
          %780 = vmatprep.subr.mxu0 0.0
          %781 = vmatpush1.msra.mxu0 0.0
          %782 = vmatprep.subr.mxu0 0.0
          %783 = vmatpush1.msra.mxu0 0.0
          %784 = vmatprep.subr.mxu0 0.0
          %785 = vmatpush1.msra.mxu0 0.0
          %786 = vmatprep.subr.mxu0 0.0
          %787 = vmatpush1.msra.mxu0 0.0
          %788 = vmatprep.subr.mxu0 0.0
          %789 = vmatpush1.msra.mxu0 0.0
          %790 = vmatprep.subr.mxu0 0.0
          %791 = vmatpush1.msra.mxu0 0.0
          %792 = vmatprep.subr.mxu0 0.0
          %793 = vmatpush1.msra.mxu0 0.0
          %794 = vmatprep.subr.mxu0 0.0
          %795 = vmatpush1.msra.mxu0 0.0
          %796 = vmatprep.subr.mxu0 0.0
          %797 = vmatpush1.msra.mxu0 0.0
          %798 = vmatprep.subr.mxu0 0.0
          %799 = vmatpush1.msra.mxu0 0.0
          %800 = vmatprep.subr.mxu0 0.0
          %801 = vmatpush1.msra.mxu0 0.0
          %802 = vmatprep.subr.mxu0 0.0
          %803 = vmatpush1.msra.mxu0 0.0
          %804 = vmatprep.subr.mxu0 0.0
          %805 = vmatpush1.msra.mxu0 0.0
          %806 = vmatprep.subr.mxu0 0.0
          %807 = vmatpush1.msra.mxu0 0.0
          %808 = vmatprep.subr.mxu0 0.0
          %809 = vmatpush1.msra.mxu0 0.0
          %810 = vmatprep.subr.mxu0 0.0
          %811 = vmatpush1.msra.mxu0 0.0
          %812 = vmatprep.mubr.f32.mxu0 0.0
          %813 = vmatmul.mubr.f32.gmra.mrb[0].mxu0 %v743
          %v814 = vpop.f32.mrb[0].mxu0
          %v815 = vadd.f32 %v740, %v814
          %v816 = vpop.f32.mrb[0].mxu0
          %817 = vmatprep.mubr.f32.mxu0 0.0
          %818 = vmatmul.mubr.f32.gmra.mrb[0].mxu0 %v746
          %v819 = vpop.f32.mrb[0].mxu0
          %v820 = vadd.f32 %v740, %v819
          %v821 = vpop.f32.mrb[0].mxu0
          %822 = vdwg.mxu0
          %s823 = scalar_lea.vmem [#allocation3], %s726
          %824 = vst.msk [vmem:[%s823] sm:$0xff] %vm728, %v815
          %825 = vst.msk [vmem:[%s823 + $0x8] sm:$0xff] %vm728, %v820
        $region68: #{tpu_custom_call.1} parent=63 // pred_fallthru
          _
        %s826 = smul.u32 %s37, 16
        %s827 = scalar_lea.vmem [#allocation2], %s826
        %v828 = vld [vmem:[%s827] sm:$0xff]
        %v829 = vld [vmem:[%s827 + $0x8] sm:$0xff]
        %s830 = scalar_lea.vmem [#allocation3], %s826
        %v831 = vld [vmem:[%s830] sm:$0xff]
        %v832 = vld [vmem:[%s830 + $0x8] sm:$0xff]
        %v833 = vld [vmem:[%s583] sm:$0xff]
        %v834 = vld [vmem:[%s583 + $0x8] sm:$0xff]
        %v835 = vld [vmem:[%s599] sm:$0xff]
        %v836 = vld [vmem:[%s599 + $0x8] sm:$0xff]
        %v837 = vld [vmem:[%s599 + $0x10] sm:$0xff]
        %v838 = vld [vmem:[%s599 + $0x18] sm:$0xff]
        %v839 = vld [vmem:[%s602] sm:$0x1]
        %v841 = vlaneseq
        %v842 = vshrl.u32 %v841, 7
        %v843 = vsub.s32 0, %v842
        %v844 = vrot.slane %v839, %v843
        %vm846 = vcmask 261120
        %v848 = vsel %vm846, %v833, 0
        %v851 = vsel %vm846, %v834, 0
        %853 = vmatprep.subr.mxu0 0.0
        %854 = vmatpush1.msra.mxu0 %v835
        %855 = vmatprep.subr.mxu0 0.0
        %856 = vmatpush1.msra.mxu0 %v836
        %857 = vmatprep.subr.mxu0 0.0
        %858 = vmatpush1.msra.mxu0 %v837
        %859 = vmatprep.subr.mxu0 0.0
        %860 = vmatpush1.msra.mxu0 %v838
        %861 = vmatprep.subr.mxu0 0.0
        %862 = vmatpush1.msra.mxu0 0.0
        %863 = vmatprep.subr.mxu0 0.0
        %864 = vmatpush1.msra.mxu0 0.0
        %865 = vmatprep.subr.mxu0 0.0
        %866 = vmatpush1.msra.mxu0 0.0
        %867 = vmatprep.subr.mxu0 0.0
        %868 = vmatpush1.msra.mxu0 0.0
        %869 = vmatprep.subr.mxu0 0.0
        %870 = vmatpush1.msra.mxu0 0.0
        %871 = vmatprep.subr.mxu0 0.0
        %872 = vmatpush1.msra.mxu0 0.0
        %873 = vmatprep.subr.mxu0 0.0
        %874 = vmatpush1.msra.mxu0 0.0
        %875 = vmatprep.subr.mxu0 0.0
        %876 = vmatpush1.msra.mxu0 0.0
        %877 = vmatprep.subr.mxu0 0.0
        %878 = vmatpush1.msra.mxu0 0.0
        %879 = vmatprep.subr.mxu0 0.0
        %880 = vmatpush1.msra.mxu0 0.0
        %881 = vmatprep.subr.mxu0 0.0
        %882 = vmatpush1.msra.mxu0 0.0
        %883 = vmatprep.subr.mxu0 0.0
        %884 = vmatpush1.msra.mxu0 0.0
        %885 = vmatprep.subr.mxu0 0.0
        %886 = vmatpush1.msra.mxu0 0.0
        %887 = vmatprep.subr.mxu0 0.0
        %888 = vmatpush1.msra.mxu0 0.0
        %889 = vmatprep.subr.mxu0 0.0
        %890 = vmatpush1.msra.mxu0 0.0
        %891 = vmatprep.subr.mxu0 0.0
        %892 = vmatpush1.msra.mxu0 0.0
        %893 = vmatprep.subr.mxu0 0.0
        %894 = vmatpush1.msra.mxu0 0.0
        %895 = vmatprep.subr.mxu0 0.0
        %896 = vmatpush1.msra.mxu0 0.0
        %897 = vmatprep.subr.mxu0 0.0
        %898 = vmatpush1.msra.mxu0 0.0
        %899 = vmatprep.subr.mxu0 0.0
        %900 = vmatpush1.msra.mxu0 0.0
        %901 = vmatprep.subr.mxu0 0.0
        %902 = vmatpush1.msra.mxu0 0.0
        %903 = vmatprep.subr.mxu0 0.0
        %904 = vmatpush1.msra.mxu0 0.0
        %905 = vmatprep.subr.mxu0 0.0
        %906 = vmatpush1.msra.mxu0 0.0
        %907 = vmatprep.subr.mxu0 0.0
        %908 = vmatpush1.msra.mxu0 0.0
        %909 = vmatprep.subr.mxu0 0.0
        %910 = vmatpush1.msra.mxu0 0.0
        %911 = vmatprep.subr.mxu0 0.0
        %912 = vmatpush1.msra.mxu0 0.0
        %913 = vmatprep.subr.mxu0 0.0
        %914 = vmatpush1.msra.mxu0 0.0
        %915 = vmatprep.subr.mxu0 0.0
        %916 = vmatpush1.msra.mxu0 0.0
        %917 = vmatprep.mubr.f32.mxu0 0.0
        %918 = vmatmul.mubr.f32.gmra.mrb[0].mxu0 %v848
        %v919 = vpop.f32.mrb[0].mxu0
        %v920 = vadd.f32 %v844, %v919
        %v921 = vpop.f32.mrb[0].mxu0
        %922 = vmatprep.mubr.f32.mxu0 0.0
        %923 = vmatmul.mubr.f32.gmra.mrb[0].mxu0 %v851
        %v924 = vpop.f32.mrb[0].mxu0
        %v925 = vadd.f32 %v844, %v924
        %v926 = vpop.f32.mrb[0].mxu0
        %927 = vdwg.mxu0
        %vm928 = vcmask 64512
        %v930 = vsel %vm928, %v920, 0
        %v933 = vsel %vm928, %v925, 0
        %v936 = vsel %vm928, %v828, 0
        %v939 = vsel %vm928, %v829, 0
        %941 = vmatprep.subr.mxu0 0.0
        %942 = vmatpush1.xpose.msra.mxu0 %v936
        %943 = vmatprep.subr.mxu0 0.0
        %944 = vmatpush1.xpose.msra.mxu0 %v939
        %945 = vmatprep.subr.mxu0 0.0
        %946 = vmatpush1.xpose.msra.mxu0 0.0
        %947 = vmatprep.subr.mxu0 0.0
        %948 = vmatpush1.xpose.msra.mxu0 0.0
        %949 = vmatprep.subr.mxu0 0.0
        %950 = vmatpush1.xpose.msra.mxu0 0.0
        %951 = vmatprep.subr.mxu0 0.0
        %952 = vmatpush1.xpose.msra.mxu0 0.0
        %953 = vmatprep.subr.mxu0 0.0
        %954 = vmatpush1.xpose.msra.mxu0 0.0
        %955 = vmatprep.subr.mxu0 0.0
        %956 = vmatpush1.xpose.msra.mxu0 0.0
        %957 = vmatprep.subr.mxu0 0.0
        %958 = vmatpush1.xpose.msra.mxu0 0.0
        %959 = vmatprep.subr.mxu0 0.0
        %960 = vmatpush1.xpose.msra.mxu0 0.0
        %961 = vmatprep.subr.mxu0 0.0
        %962 = vmatpush1.xpose.msra.mxu0 0.0
        %963 = vmatprep.subr.mxu0 0.0
        %964 = vmatpush1.xpose.msra.mxu0 0.0
        %965 = vmatprep.subr.mxu0 0.0
        %966 = vmatpush1.xpose.msra.mxu0 0.0
        %967 = vmatprep.subr.mxu0 0.0
        %968 = vmatpush1.xpose.msra.mxu0 0.0
        %969 = vmatprep.subr.mxu0 0.0
        %970 = vmatpush1.xpose.msra.mxu0 0.0
        %971 = vmatprep.subr.mxu0 0.0
        %972 = vmatpush1.xpose.msra.mxu0 0.0
        %973 = vmatprep.subr.mxu0 0.0
        %974 = vmatpush1.xpose.msra.mxu0 0.0
        %975 = vmatprep.subr.mxu0 0.0
        %976 = vmatpush1.xpose.msra.mxu0 0.0
        %977 = vmatprep.subr.mxu0 0.0
        %978 = vmatpush1.xpose.msra.mxu0 0.0
        %979 = vmatprep.subr.mxu0 0.0
        %980 = vmatpush1.xpose.msra.mxu0 0.0
        %981 = vmatprep.subr.mxu0 0.0
        %982 = vmatpush1.xpose.msra.mxu0 0.0
        %983 = vmatprep.subr.mxu0 0.0
        %984 = vmatpush1.xpose.msra.mxu0 0.0
        %985 = vmatprep.subr.mxu0 0.0
        %986 = vmatpush1.xpose.msra.mxu0 0.0
        %987 = vmatprep.subr.mxu0 0.0
        %988 = vmatpush1.xpose.msra.mxu0 0.0
        %989 = vmatprep.subr.mxu0 0.0
        %990 = vmatpush1.xpose.msra.mxu0 0.0
        %991 = vmatprep.subr.mxu0 0.0
        %992 = vmatpush1.xpose.msra.mxu0 0.0
        %993 = vmatprep.subr.mxu0 0.0
        %994 = vmatpush1.xpose.msra.mxu0 0.0
        %995 = vmatprep.subr.mxu0 0.0
        %996 = vmatpush1.xpose.msra.mxu0 0.0
        %997 = vmatprep.subr.mxu0 0.0
        %998 = vmatpush1.xpose.msra.mxu0 0.0
        %999 = vmatprep.subr.mxu0 0.0
        %1000 = vmatpush1.xpose.msra.mxu0 0.0
        %1001 = vmatprep.subr.mxu0 0.0
        %1002 = vmatpush1.xpose.msra.mxu0 0.0
        %1003 = vmatprep.subr.mxu0 0.0
        %1004 = vmatpush1.xpose.msra.mxu0 0.0
        %1005 = vmatprep.mubr.f32.mxu0 0.0
        %1006 = vmatmul.mubr.f32.gmra.mrb[0].mxu0 %v930
        %v1007 = vpop.f32.mrb[0].mxu0
        %v1008 = vadd.f32 0.0, %v1007
        %v1009 = vpop.f32.mrb[0].mxu0
        %1010 = vmatprep.mubr.f32.mxu0 0.0
        %1011 = vmatmul.mubr.f32.gmra.mrb[0].mxu0 %v933
        %v1012 = vpop.f32.mrb[0].mxu0
        %v1013 = vadd.f32 0.0, %v1012
        %v1014 = vpop.f32.mrb[0].mxu0
        %1015 = vdwg.mxu0
        %v1016 = vmul.f32 %v1008, 0.35355338
        %v1017 = vmul.f32 %v1013, 0.35355338
        %vm1018 = vcmask 130048
        %v1019 = vsel %vm1018, %v1016, -inf
        %1020 = vmax.xlane.f32.xlu0 %v1019
        %v1021 = vpop.xlane.xlu0 %1020
        %v1022 = vsel %vm1018, %v1017, -inf
        %1023 = vmax.xlane.f32.xlu0 %v1022
        %v1024 = vpop.xlane.xlu0 %1023
        %v1025 = vsub.f32 %v1016, %v1021
        %v1026 = vsub.f32 %v1017, %v1024
        %v1027 = vmul.f32 %v1025, 1.442695
        %v1028 = vpow.pop %v1027
        %v1029 = vmul.f32 %v1026, 1.442695
        %v1030 = vpow.pop %v1029
        %v1031 = vsel %vm1018, %v1016, inf
        %1032 = vmin.xlane.f32.xlu0 %v1031
        %v1033 = vpop.xlane.xlu0 %1032
        %v1034 = vsel %vm1018, %v1017, inf
        %1035 = vmin.xlane.f32.xlu0 %v1034
        %v1036 = vpop.xlane.xlu0 %1035
        loop: start=0, step=1, limit=32
        $region69: #{tpu_custom_call.1} parent=63 // loop_pre_header
          _
        $region70: #{tpu_custom_call.1} parent=63 // loop_header
          %s1038 = sphi 0, %s1042
          %p1039 = scmp.ge.s32.totalorder %s1038, 32
          %v1043 = vphi %v1033, %v1063
          %v1044 = vphi %v1036, %v1064
          %v1045 = vphi %v1021, %v1065
          %v1046 = vphi %v1024, %v1066
        $region71: #{tpu_custom_call.1} parent=63 // loop_header_branch
          %1041 = sbr.rel (%p1039) target = $region75
        $region72: #{tpu_custom_call.1} parent=63 // loop_body
          %v1047 = vadd.f32 %v1043, %v1045
          %v1048 = vadd.f32 %v1044, %v1046
          %v1049 = vmul.f32 %v1047, 0.5
          %v1050 = vmul.f32 %v1048, 0.5
          %vm1051 = vcmp.ge.f32.partialorder %v1016, %v1049
          %vm1052 = vcmp.ge.f32.partialorder %v1017, %v1050
          %v1053 = vsel %vm1051, 1.0, 0.0
          %v1054 = vsel %vm1052, 1.0, 0.0
          %v1055 = vsel %vm1018, %v1053, 0.0
          %1056 = vadd.xlane.f32.xlu0 %v1055
          %v1057 = vpop.xlane.xlu0 %1056
          %v1058 = vsel %vm1018, %v1054, 0.0
          %1059 = vadd.xlane.f32.xlu0 %v1058
          %v1060 = vpop.xlane.xlu0 %1059
          %vm1061 = vcmp.ge.f32.partialorder %v1057, 4.0
          %vm1062 = vcmp.ge.f32.partialorder %v1060, 4.0
          %v1063 = vsel %vm1061, %v1049, %v1043
          %v1064 = vsel %vm1062, %v1050, %v1044
          %v1065 = vsel %vm1061, %v1045, %v1049
          %v1066 = vsel %vm1062, %v1046, %v1050
        $region73: #{tpu_custom_call.1} parent=63 // loop_footer
          %s1042 = sadd.s32 1, %s1038
        $region74: #{tpu_custom_call.1} parent=63 // loop_footer_branch
          %1037 = sbr.rel target = $region70
        $region75: #{tpu_custom_call.1} parent=63 // loop_exit
          _
        %vm1067 = vcmp.ge.f32.partialorder %v1016, %v1043
        %vm1068 = vcmp.ge.f32.partialorder %v1017, %v1044
        %v1069 = vsel %vm1067, %v1028, 0.0
        %v1070 = vsel %vm1068, %v1030, 0.0
        %v1071 = vsel %vm1018, %v1069, 0.0
        %1072 = vadd.xlane.f32.xlu0 %v1071
        %v1073 = vpop.xlane.xlu0 %1072
        %v1074 = vsel %vm1018, %v1070, 0.0
        %1075 = vadd.xlane.f32.xlu0 %v1074
        %v1076 = vpop.xlane.xlu0 %1075
        %v1077 = vrcp.pop %v1073
        %v1078 = vrcp.pop %v1076
        %v1079 = vmul.f32 %v1069, %v1077
        %v1080 = vmul.f32 %v1070, %v1078
        %1081 = vst.msk [vmem:[%s574] sm:$0xff] %vm1018, %v1079
        %1082 = vst.msk [vmem:[%s574 + $0x8] sm:$0xff] %vm1018, %v1080
        %v1084 = vsel %vm1018, %v1079, 0
        %v1087 = vsel %vm1018, %v1080, 0
        %1089 = vmatprep.subr.mxu0 0.0
        %1090 = vmatpush1.msra.mxu0 %v831
        %1091 = vmatprep.subr.mxu0 0.0
        %1092 = vmatpush1.msra.mxu0 %v832
        %1093 = vmatprep.subr.mxu0 0.0
        %1094 = vmatpush1.msra.mxu0 0.0
        %1095 = vmatprep.subr.mxu0 0.0
        %1096 = vmatpush1.msra.mxu0 0.0
        %1097 = vmatprep.subr.mxu0 0.0
        %1098 = vmatpush1.msra.mxu0 0.0
        %1099 = vmatprep.subr.mxu0 0.0
        %1100 = vmatpush1.msra.mxu0 0.0
        %1101 = vmatprep.subr.mxu0 0.0
        %1102 = vmatpush1.msra.mxu0 0.0
        %1103 = vmatprep.subr.mxu0 0.0
        %1104 = vmatpush1.msra.mxu0 0.0
        %1105 = vmatprep.subr.mxu0 0.0
        %1106 = vmatpush1.msra.mxu0 0.0
        %1107 = vmatprep.subr.mxu0 0.0
        %1108 = vmatpush1.msra.mxu0 0.0
        %1109 = vmatprep.subr.mxu0 0.0
        %1110 = vmatpush1.msra.mxu0 0.0
        %1111 = vmatprep.subr.mxu0 0.0
        %1112 = vmatpush1.msra.mxu0 0.0
        %1113 = vmatprep.subr.mxu0 0.0
        %1114 = vmatpush1.msra.mxu0 0.0
        %1115 = vmatprep.subr.mxu0 0.0
        %1116 = vmatpush1.msra.mxu0 0.0
        %1117 = vmatprep.subr.mxu0 0.0
        %1118 = vmatpush1.msra.mxu0 0.0
        %1119 = vmatprep.subr.mxu0 0.0
        %1120 = vmatpush1.msra.mxu0 0.0
        %1121 = vmatprep.subr.mxu0 0.0
        %1122 = vmatpush1.msra.mxu0 0.0
        %1123 = vmatprep.subr.mxu0 0.0
        %1124 = vmatpush1.msra.mxu0 0.0
        %1125 = vmatprep.subr.mxu0 0.0
        %1126 = vmatpush1.msra.mxu0 0.0
        %1127 = vmatprep.subr.mxu0 0.0
        %1128 = vmatpush1.msra.mxu0 0.0
        %1129 = vmatprep.subr.mxu0 0.0
        %1130 = vmatpush1.msra.mxu0 0.0
        %1131 = vmatprep.subr.mxu0 0.0
        %1132 = vmatpush1.msra.mxu0 0.0
        %1133 = vmatprep.subr.mxu0 0.0
        %1134 = vmatpush1.msra.mxu0 0.0
        %1135 = vmatprep.subr.mxu0 0.0
        %1136 = vmatpush1.msra.mxu0 0.0
        %1137 = vmatprep.subr.mxu0 0.0
        %1138 = vmatpush1.msra.mxu0 0.0
        %1139 = vmatprep.subr.mxu0 0.0
        %1140 = vmatpush1.msra.mxu0 0.0
        %1141 = vmatprep.subr.mxu0 0.0
        %1142 = vmatpush1.msra.mxu0 0.0
        %1143 = vmatprep.subr.mxu0 0.0
        %1144 = vmatpush1.msra.mxu0 0.0
        %1145 = vmatprep.subr.mxu0 0.0
        %1146 = vmatpush1.msra.mxu0 0.0
        %1147 = vmatprep.subr.mxu0 0.0
        %1148 = vmatpush1.msra.mxu0 0.0
        %1149 = vmatprep.subr.mxu0 0.0
        %1150 = vmatpush1.msra.mxu0 0.0
        %1151 = vmatprep.subr.mxu0 0.0
        %1152 = vmatpush1.msra.mxu0 0.0
        %1153 = vmatprep.mubr.f32.mxu0 0.0
        %1154 = vmatmul.mubr.f32.gmra.mrb[0].mxu0 %v1084
        %v1155 = vpop.f32.mrb[0].mxu0
        %v1156 = vadd.f32 0.0, %v1155
        %v1157 = vpop.f32.mrb[0].mxu0
        %1158 = vmatprep.mubr.f32.mxu0 0.0
        %1159 = vmatmul.mubr.f32.gmra.mrb[0].mxu0 %v1087
        %v1160 = vpop.f32.mrb[0].mxu0
        %v1161 = vadd.f32 0.0, %v1160
        %v1162 = vpop.f32.mrb[0].mxu0
        %1163 = vdwg.mxu0
        %v1164 = vld [vmem:[%s622] sm:$0xff]
        %v1166 = vsel %vm928, %v1156, 0
        %v1169 = vsel %vm928, %v1161, 0
        %1171 = vmatprep.subr.mxu0 0.0
        %1172 = vmatpush1.msra.mxu0 %v1164
        %1173 = vmatprep.subr.mxu0 0.0
        %1174 = vmatpush1.msra.mxu0 0.0
        %1175 = vmatprep.subr.mxu0 0.0
        %1176 = vmatpush1.msra.mxu0 0.0
        %1177 = vmatprep.subr.mxu0 0.0
        %1178 = vmatpush1.msra.mxu0 0.0
        %1179 = vmatprep.subr.mxu0 0.0
        %1180 = vmatpush1.msra.mxu0 0.0
        %1181 = vmatprep.subr.mxu0 0.0
        %1182 = vmatpush1.msra.mxu0 0.0
        %1183 = vmatprep.subr.mxu0 0.0
        %1184 = vmatpush1.msra.mxu0 0.0
        %1185 = vmatprep.subr.mxu0 0.0
        %1186 = vmatpush1.msra.mxu0 0.0
        %1187 = vmatprep.subr.mxu0 0.0
        %1188 = vmatpush1.msra.mxu0 0.0
        %1189 = vmatprep.subr.mxu0 0.0
        %1190 = vmatpush1.msra.mxu0 0.0
        %1191 = vmatprep.subr.mxu0 0.0
        %1192 = vmatpush1.msra.mxu0 0.0
        %1193 = vmatprep.subr.mxu0 0.0
        %1194 = vmatpush1.msra.mxu0 0.0
        %1195 = vmatprep.subr.mxu0 0.0
        %1196 = vmatpush1.msra.mxu0 0.0
        %1197 = vmatprep.subr.mxu0 0.0
        %1198 = vmatpush1.msra.mxu0 0.0
        %1199 = vmatprep.subr.mxu0 0.0
        %1200 = vmatpush1.msra.mxu0 0.0
        %1201 = vmatprep.subr.mxu0 0.0
        %1202 = vmatpush1.msra.mxu0 0.0
        %1203 = vmatprep.subr.mxu0 0.0
        %1204 = vmatpush1.msra.mxu0 0.0
        %1205 = vmatprep.subr.mxu0 0.0
        %1206 = vmatpush1.msra.mxu0 0.0
        %1207 = vmatprep.subr.mxu0 0.0
        %1208 = vmatpush1.msra.mxu0 0.0
        %1209 = vmatprep.subr.mxu0 0.0
        %1210 = vmatpush1.msra.mxu0 0.0
        %1211 = vmatprep.subr.mxu0 0.0
        %1212 = vmatpush1.msra.mxu0 0.0
        %1213 = vmatprep.subr.mxu0 0.0
        %1214 = vmatpush1.msra.mxu0 0.0
        %1215 = vmatprep.subr.mxu0 0.0
        %1216 = vmatpush1.msra.mxu0 0.0
        %1217 = vmatprep.subr.mxu0 0.0
        %1218 = vmatpush1.msra.mxu0 0.0
        %1219 = vmatprep.subr.mxu0 0.0
        %1220 = vmatpush1.msra.mxu0 0.0
        %1221 = vmatprep.subr.mxu0 0.0
        %1222 = vmatpush1.msra.mxu0 0.0
        %1223 = vmatprep.subr.mxu0 0.0
        %1224 = vmatpush1.msra.mxu0 0.0
        %1225 = vmatprep.subr.mxu0 0.0
        %1226 = vmatpush1.msra.mxu0 0.0
        %1227 = vmatprep.subr.mxu0 0.0
        %1228 = vmatpush1.msra.mxu0 0.0
        %1229 = vmatprep.subr.mxu0 0.0
        %1230 = vmatpush1.msra.mxu0 0.0
        %1231 = vmatprep.subr.mxu0 0.0
        %1232 = vmatpush1.msra.mxu0 0.0
        %1233 = vmatprep.subr.mxu0 0.0
        %1234 = vmatpush1.msra.mxu0 0.0
        %1235 = vmatprep.mubr.f32.mxu0 0.0
        %1236 = vmatmul.mubr.f32.gmra.mrb[0].mxu0 %v1166
        %v1237 = vpop.f32.mrb[0].mxu0
        %v1238 = vadd.f32 0.0, %v1237
        %v1239 = vpop.f32.mrb[0].mxu0
        %1240 = vmatprep.mubr.f32.mxu0 0.0
        %1241 = vmatmul.mubr.f32.gmra.mrb[0].mxu0 %v1169
        %v1242 = vpop.f32.mrb[0].mxu0
        %v1243 = vadd.f32 0.0, %v1242
        %v1244 = vpop.f32.mrb[0].mxu0
        %1245 = vdwg.mxu0
        %p1246 = scmp.eq.s32.totalorder %s37, 0
        // Predicated region
        $region76: #{tpu_custom_call.1} parent=63 // pred_check
          %p1247 = pneg %p1246
        $region77: #{tpu_custom_call.1} parent=63 // pred_check_branch
          %1249 = sbr.rel (%p1247) target = $region79
        $region78: #{tpu_custom_call.1} parent=63 // pred_region
          %v1250 = vld [vmem:[%s10] sm:$0x1]
          %v1252 = vlaneseq
          %v1253 = vshrl.u32 %v1252, 7
          %v1254 = vsub.s32 0, %v1253
          %v1255 = vrot.slane %v1250, %v1254
          %v1257 = vadd.f32 %v1238, %v1255
          %v1258 = vadd.f32 %v1243, %v1255
          %1259 = vst.msk [vmem:[%s567] sm:$0xff] %vm846, %v1257
          %1260 = vst.msk [vmem:[%s567 + $0x8] sm:$0xff] %vm846, %v1258
        $region79: #{tpu_custom_call.1} parent=63 // pred_fallthru
          _
        %p1261 = scmp.gt.s32.totalorder %s37, 0
        // Predicated region
        $region80: #{tpu_custom_call.1} parent=63 // pred_check
          %p1262 = pneg %p1261
        $region81: #{tpu_custom_call.1} parent=63 // pred_check_branch
          %1264 = sbr.rel (%p1262) target = $region83
        $region82: #{tpu_custom_call.1} parent=63 // pred_region
          %v1265 = vld [vmem:[%s567] sm:$0xff]
          %v1266 = vld [vmem:[%s567 + $0x8] sm:$0xff]
          %v1267 = vadd.f32 %v1265, %v1238
          %v1268 = vadd.f32 %v1266, %v1243
          %1269 = vst.msk [vmem:[%s567] sm:$0xff] %vm846, %v1267
          %1270 = vst.msk [vmem:[%s567 + $0x8] sm:$0xff] %vm846, %v1268
        $region83: #{tpu_custom_call.1} parent=63 // pred_fallthru
          _
        %s1271 = sand.u32 %s342, 1
        %s1272 = scalar_lea.sflag [#allocation5], %s1271
        %s1273 = sand.u32 %s342, 1
        %s1274 = smul.addr %s1273, 16
        %s1275 = scalar_lea.vmem [#allocation4], %s1274
        %s1276 = sand.u32 %s372, 1
        %s1277 = scalar_lea.sflag [#allocation7], %s1276
        %s1278 = sand.u32 %s372, 1
        %s1279 = smul.addr %s1278, 16
        %s1280 = scalar_lea.vmem [#allocation6], %s1279
        // Predicated region
        $region84: #{tpu_custom_call.1} parent=63 // pred_check
          %p1281 = pneg %p352
        $region85: #{tpu_custom_call.1} parent=63 // pred_check_branch
          %1283 = sbr.rel (%p1281) target = $region87
        $region86: #{tpu_custom_call.1} parent=63 // pred_region
          %s1284 = smul.u32 2, %s36
          %s1286 = ssub.s32 256, 256
          %1287 = vsyncadd %s1272, %s1286
          %s1288 = smul.addr %s35, 2
          %s1289 = sadd.s32 %s1284, %s1288
          %s1290 = smul.addr %s1289, 128
          %s1291 = scalar_lea.hbm %s11, %s1290
          %s1292 = sshll.u32 %s1275, 4
          %s1293 = int_to_ptr.vmem [resolvable:$true] %s1292
          %1298 = dma.vmem_to_hbm [thread:$0]  %s1293, 256, %s1291, %s1272, 128, 128, 8
        $region87: #{tpu_custom_call.1} parent=63 // pred_fallthru
          _
        // Predicated region
        $region88: #{tpu_custom_call.1} parent=63 // pred_check
          %p1299 = pneg %p382
        $region89: #{tpu_custom_call.1} parent=63 // pred_check_branch
          %1301 = sbr.rel (%p1299) target = $region91
        $region90: #{tpu_custom_call.1} parent=63 // pred_region
          %s1302 = smul.u32 2, %s36
          %s1304 = ssub.s32 256, 256
          %1305 = vsyncadd %s1277, %s1304
          %s1306 = smul.addr %s37, 2
          %s1307 = sadd.s32 %s1302, %s1306
          %s1308 = smul.addr %s35, 8
          %s1309 = sadd.s32 %s1307, %s1308
          %s1310 = smul.addr %s1309, 128
          %s1311 = scalar_lea.hbm %s12, %s1310
          %s1312 = sshll.u32 %s1280, 4
          %s1313 = int_to_ptr.vmem [resolvable:$true] %s1312
          %1318 = dma.vmem_to_hbm [thread:$0]  %s1313, 256, %s1311, %s1277, 128, 128, 8
        $region91: #{tpu_custom_call.1} parent=63 // pred_fallthru
          _
      $region64: #{tpu_custom_call.1} parent=5 // pred_fallthru
        _
      %p1319 = scmp.le.s32.totalorder 2, %s25
      // Predicated region
      $region92: #{tpu_custom_call.1} parent=5 // pred_check
        %p1320 = pneg %p1319
      $region93: #{tpu_custom_call.1} parent=5 // pred_check_branch
        %1322 = sbr.rel (%p1320) target = $region95
      $region94: #{tpu_custom_call.1} parent=5 // pred_region
        %s1323 = ssub.s32 %s25, 2
        // Predicated region
        $region96: #{tpu_custom_call.1} parent=94 // pred_check
          %p1324 = pneg %p358
        $region97: #{tpu_custom_call.1} parent=94 // pred_check_branch
          %1326 = sbr.rel (%p1324) target = $region99
        $region98: #{tpu_custom_call.1} parent=94 // pred_region
          %s1327 = sand.u32 %s343, 1
          %s1328 = scalar_lea.sflag [#allocation5], %s1327
          %s1329 = sand.u32 %s343, 1
          %s1330 = smul.addr %s1329, 16
          %s1331 = scalar_lea.vmem [#allocation4], %s1330
          %1332 = dma.done %s1328, 256
        $region99: #{tpu_custom_call.1} parent=94 // pred_fallthru
          _
        // Predicated region
        $region100: #{tpu_custom_call.1} parent=94 // pred_check
          %p1333 = pneg %p388
        $region101: #{tpu_custom_call.1} parent=94 // pred_check_branch
          %1335 = sbr.rel (%p1333) target = $region103
        $region102: #{tpu_custom_call.1} parent=94 // pred_region
          %s1336 = sand.u32 %s373, 1
          %s1337 = scalar_lea.sflag [#allocation7], %s1336
          %s1338 = sand.u32 %s373, 1
          %s1339 = smul.addr %s1338, 16
          %s1340 = scalar_lea.vmem [#allocation6], %s1339
          %1341 = dma.done %s1337, 256
        $region103: #{tpu_custom_call.1} parent=94 // pred_fallthru
          _
      $region95: #{tpu_custom_call.1} parent=5 // pred_fallthru
        _
    $region6: #{tpu_custom_call.1} parent=1 // loop_footer
      %s29 = sadd.s32 1, %s25
    $region7: #{tpu_custom_call.1} parent=1 // loop_footer_branch
      %24 = sbr.rel target = $region3
    $region8: #{tpu_custom_call.1} parent=1 // loop_exit
      _
    %1342 = vsyncpa [#allocation5], 1
    %s1343 = scalar_lea.sflag [#allocation5], 1
    %1344 = vsyncpa %s1343, 1
    %1345 = vsyncpa [#allocation7], 1
    %s1346 = scalar_lea.sflag [#allocation7], 1
    %1347 = vsyncpa %s1346, 1

</llo_original>
